<compile_context>
chip_gen: v7x
topology: tpu7x:2x2x1
jax: 0.10.0
libtpu: 0.0.40
codegen_flags: <defaults>
</compile_context>

<pallas_src>
import functools
import math

import jax
import jax.numpy as jnp
import numpy as np
from jax.experimental import pallas as pl
from jax.experimental.pallas import tpu as pltpu


def _mha_kernel(q_ref, k_ref, v_ref, wq_ref, wk_ref, wv_ref, wfc_ref,
                gamma_ref, beta_ref, out_ref, *rest,
                block_h, d_k, d_v, eps, compute_dtype, return_attn,
                num_head_blocks):
    pos = 0
    attn_ref = None
    acc_ref = None
    if return_attn:
        attn_ref = rest[pos]
        pos += 1
    if num_head_blocks > 1:
        acc_ref = rest[pos]
        pos += 1

    hb = pl.program_id(1)                       # head-block index (reduction axis)

    bt, L, d_model = q_ref.shape
    rows = bt * L
    cd = compute_dtype

    # Fold batch into the sublane axis: lane-dense (rows, d_model) operands.
    q2 = q_ref[...].reshape(rows, d_model)      # f32; also the residual
    k2 = k_ref[...].reshape(rows, d_model)      # already compute dtype
    v2 = v_ref[...].reshape(rows, d_model)

    # Head-block weights (VMEM-resident, DMA'd once thanks to the constant
    # index_map).  1/sqrt(d_k) is already folded into wq.
    wq = wq_ref[hb]                             # (d_model, block_h*d_k)
    wk = wk_ref[hb]                             # (d_model, block_h*d_k)
    wv = wv_ref[hb]                             # (d_model, block_h*d_v)

    # Wide projections: N = block_h*d_k fills the 128/256-wide MXU.
    Qh = jnp.dot(q2.astype(cd), wq, preferred_element_type=jnp.float32)
    Kh = jnp.dot(k2, wk, preferred_element_type=jnp.float32)
    Vh = jnp.dot(v2, wv, preferred_element_type=jnp.float32)

    head_outs = []
    for hh in range(block_h):                   # static loop over heads in block
        qh = Qh[:, hh * d_k:(hh + 1) * d_k].reshape(bt, L, d_k)
        kh = Kh[:, hh * d_k:(hh + 1) * d_k].reshape(bt, L, d_k)
        vh = Vh[:, hh * d_v:(hh + 1) * d_v].reshape(bt, L, d_v)

        # scores[b, i, j] = sum_d qh[b,i,d] * kh[b,j,d]   (no explicit K^T)
        scores = jnp.einsum("bqd,bkd->bqk", qh.astype(cd), kh.astype(cd),
                            preferred_element_type=jnp.float32)    # (bt, L, L)

        # Exact softmax over keys in f32 (exact reciprocal keeps the returned
        # probabilities consistent with the PV product and the reference).
        m = jnp.max(scores, axis=-1, keepdims=True)
        e = jnp.exp(scores - m)
        s = jnp.sum(e, axis=-1, keepdims=True)
        attn_h = e * (1.0 / s)                                      # (bt, L, L)

        if return_attn:
            attn_ref[:, hh:hh + 1, :, :] = (
                attn_h.reshape(bt, 1, L, L).astype(attn_ref.dtype))

        head_out = jnp.einsum("bqk,bkd->bqd", attn_h.astype(cd), vh.astype(cd),
                              preferred_element_type=jnp.float32)   # (bt, L, d_v)
        head_outs.append(head_out)

    # Fused output projection for this head block: K = block_h*d_v.
    hidden = head_outs[0] if block_h == 1 else jnp.concatenate(head_outs, axis=-1)
    hidden = hidden.reshape(rows, block_h * d_v).astype(cd)
    contrib = jnp.dot(hidden, wfc_ref[hb],
                      preferred_element_type=jnp.float32)           # (rows, d_model)

    def _finalize(proj):
        outv = proj + q2                                            # residual (f32)
        mean = jnp.mean(outv, axis=-1, keepdims=True)
        centered = outv - mean
        var = jnp.mean(centered * centered, axis=-1, keepdims=True)
        normed = centered * jax.lax.rsqrt(var + eps)
        normed = normed * gamma_ref[...] + beta_ref[...]
        out_ref[...] = normed.reshape(bt, L, d_model).astype(out_ref.dtype)

    if num_head_blocks == 1:
        _finalize(contrib)                       # no accumulator needed
    else:
        @pl.when(hb == 0)
        def _():
            acc_ref[...] = jnp.zeros_like(acc_ref)

        acc_ref[...] += contrib

        @pl.when(hb == num_head_blocks - 1)
        def _():
            _finalize(acc_ref[...])


def vanilla_mha(q, k, v, w_qs, w_ks, w_vs, w_fc, gamma, beta, *,
                n_head, d_k, d_v, eps=1e-6, block_b=None, block_h=None,
                compute_dtype=jnp.float32, attn_dtype=None, return_attn=True,
                vmem_limit_bytes=64 * 1024 * 1024):
    """q, k, v: (B, L, d_model).  Weights stored as (in, out), i.e. x @ W
    (the transpose of torch.nn.Linear.weight)."""
    B, L, d_model = q.shape
    assert w_qs.shape == (d_model, n_head * d_k)
    assert w_ks.shape == (d_model, n_head * d_k)
    assert w_vs.shape == (d_model, n_head * d_v)
    assert w_fc.shape == (n_head * d_v, d_model)

    cd = jnp.dtype(compute_dtype)
    attn_dt = jnp.dtype(q.dtype if attn_dtype is None else attn_dtype)

    # ---- head blocking: fill the MXU (N = block_h*d_k, K = block_h*d_v). ----
    if block_h is None:
        lane_target = 256                       # v6e/v7x MXU width (2x128 on v5e)
        block_h = max(1, min(n_head, lane_target // max(d_k, d_v, 1)))
        while n_head % block_h:
            block_h -= 1
    assert n_head % block_h == 0
    n_hblocks = n_head // block_h

    # ---- batch blocking from a VMEM budget (double-buffered pipeline). ----
    act = cd.itemsize
    out_it = jnp.dtype(q.dtype).itemsize
    attn_it = attn_dt.itemsize if return_attn else 0
    weight_bytes = ((2 * d_model * n_head * d_k + 2 * d_model * n_head * d_v) * act
                    + 2 * d_model * 4)
    per_b = (2 * L * d_model * 4                    # q block (f32), 2x buffered
             + 4 * L * d_model * act                # k, v blocks, 2x buffered
             + 2 * L * d_model * out_it             # out block, 2x buffered
             + 2 * block_h * L * L * attn_it        # attn block, 2x buffered
             + L * d_model * 4                      # fc accumulator scratch
             + 3 * L * block_h * max(d_k, d_v) * 4  # Qh/Kh/Vh intermediates
             + 4 * L * L * 4)                       # scores/softmax intermediates
    if block_b is None:
        budget = max(per_b, (vmem_limit_bytes * 3) // 4 - weight_bytes)
        block_b = max(1, min(B, budget // per_b))
        if B >= 2:                                  # keep >= 2 blocks on the
            block_b = min(block_b, B // 2)          # parallel axis (megacore)
        while B % block_b:
            block_b -= 1
    assert B % block_b == 0
    grid_b = B // block_b

    # ---- weight prep: head-block-major slabs, 1/sqrt(d_k) folded into Wq. ----
    inv_temp = 1.0 / math.sqrt(d_k)
    wq_h = ((w_qs * inv_temp).reshape(d_model, n_hblocks, block_h * d_k)
            .transpose(1, 0, 2).astype(cd))
    wk_h = (w_ks.reshape(d_model, n_hblocks, block_h * d_k)
            .transpose(1, 0, 2).astype(cd))
    wv_h = (w_vs.reshape(d_model, n_hblocks, block_h * d_v)
            .transpose(1, 0, 2).astype(cd))
    wfc_h = w_fc.reshape(n_hblocks, block_h * d_v, d_model).astype(cd)
    gamma2 = gamma.reshape(1, d_model).astype(jnp.float32)
    beta2 = beta.reshape(1, d_model).astype(jnp.float32)

    # K/V cast on the host side (halves their HBM->VMEM DMA in the bf16 path);
    # Q stays f32 because it is also the residual.
    k_c = k.astype(cd)
    v_c = v.astype(cd)

    kernel = functools.partial(
        _mha_kernel, block_h=block_h, d_k=d_k, d_v=d_v, eps=eps,
        compute_dtype=cd, return_attn=return_attn, num_head_blocks=n_hblocks)

    qkv_spec = pl.BlockSpec((block_b, L, d_model), lambda b, h: (b, 0, 0))
    in_specs = [
        qkv_spec,                                                        # q
        qkv_spec,                                                        # k
        qkv_spec,                                                        # v
        pl.BlockSpec((n_hblocks, d_model, block_h * d_k),
                     lambda b, h: (0, 0, 0)),                            # Wq (resident)
        pl.BlockSpec((n_hblocks, d_model, block_h * d_k),
                     lambda b, h: (0, 0, 0)),                            # Wk (resident)
        pl.BlockSpec((n_hblocks, d_model, block_h * d_v),
                     lambda b, h: (0, 0, 0)),                            # Wv (resident)
        pl.BlockSpec((n_hblocks, block_h * d_v, d_model),
                     lambda b, h: (0, 0, 0)),                            # Wfc (resident)
        pl.BlockSpec((1, d_model), lambda b, h: (0, 0)),                 # gamma
        pl.BlockSpec((1, d_model), lambda b, h: (0, 0)),                 # beta
    ]

    out_spec = pl.BlockSpec((block_b, L, d_model), lambda b, h: (b, 0, 0))
    if return_attn:
        out_shape = (jax.ShapeDtypeStruct((B, L, d_model), q.dtype),
                     jax.ShapeDtypeStruct((B, n_head, L, L), attn_dt))
        out_specs = [out_spec,
                     pl.BlockSpec((block_b, block_h, L, L),
                                  lambda b, h: (b, h, 0, 0))]
    else:
        out_shape = jax.ShapeDtypeStruct((B, L, d_model), q.dtype)
        out_specs = out_spec

    scratch_shapes = []
    if n_hblocks > 1:
        scratch_shapes.append(pltpu.VMEM((block_b * L, d_model), jnp.float32))

    return pl.pallas_call(
        kernel,
        out_shape=out_shape,
        grid_spec=pltpu.PrefetchScalarGridSpec(
            num_scalar_prefetch=0,
            grid=(grid_b, n_hblocks),               # head-block axis last (reduction)
            in_specs=in_specs,
            out_specs=out_specs,
            scratch_shapes=scratch_shapes,
        ),
        compiler_params=pltpu.CompilerParams(
            dimension_semantics=("parallel", "arbitrary"),
            vmem_limit_bytes=vmem_limit_bytes,
        ),
    )(q, k_c, v_c, wq_h, wk_h, wv_h, wfc_h, gamma2, beta2)


def reference_mha_np(q, k, v, w_qs, w_ks, w_vs, w_fc, gamma, beta,
                     *, n_head, d_k, d_v, eps=1e-6):
    """float64 NumPy reference (ground truth; avoids XLA matmul-precision noise)."""
    q = np.asarray(q, np.float64)
    k = np.asarray(k, np.float64)
    v = np.asarray(v, np.float64)
    w_qs = np.asarray(w_qs, np.float64)
    w_ks = np.asarray(w_ks, np.float64)
    w_vs = np.asarray(w_vs, np.float64)
    w_fc = np.asarray(w_fc, np.float64)
    gamma = np.asarray(gamma, np.float64)
    beta = np.asarray(beta, np.float64)

    B, L, d_model = q.shape
    residual = q
    Q = (q @ w_qs).reshape(B, L, n_head, d_k).transpose(0, 2, 1, 3)
    K = (k @ w_ks).reshape(B, L, n_head, d_k).transpose(0, 2, 1, 3)
    V = (v @ w_vs).reshape(B, L, n_head, d_v).transpose(0, 2, 1, 3)
    scores = np.einsum("bhqd,bhkd->bhqk", Q / math.sqrt(d_k), K)
    scores = scores - scores.max(-1, keepdims=True)
    attn = np.exp(scores)
    attn = attn / attn.sum(-1, keepdims=True)
    out = np.einsum("bhqk,bhkd->bhqd", attn, V)
    out = out.transpose(0, 2, 1, 3).reshape(B, L, n_head * d_v)
    out = out @ w_fc + residual
    mean = out.mean(-1, keepdims=True)
    var = ((out - mean) ** 2).mean(-1, keepdims=True)
    out = (out - mean) / np.sqrt(var + eps) * gamma + beta
    return out, attn


if __name__ == "__main__":
    # Small shapes: batch=2, seq=8, d_model=32, n_head=4, d_k=d_v=8
    B, L, d_model = 2, 8, 32
    n_head, d_k, d_v = 4, 8, 8

    key = jax.random.PRNGKey(0)
    kq, kk, kv, kwq, kwk, kwv, kwf = jax.random.split(key, 7)

    q = jax.random.normal(kq, (B, L, d_model), jnp.float32)
    k = jax.random.normal(kk, (B, L, d_model), jnp.float32)
    v = jax.random.normal(kv, (B, L, d_model), jnp.float32)

    # Deterministic parameter init (stored as (in, out)).
    scale_qk = 1.0 / math.sqrt(d_model)
    w_qs = jax.random.normal(kwq, (d_model, n_head * d_k), jnp.float32) * scale_qk
    w_ks = jax.random.normal(kwk, (d_model, n_head * d_k), jnp.float32) * scale_qk
    w_vs = jax.random.normal(kwv, (d_model, n_head * d_v), jnp.float32) * scale_qk
    w_fc = (jax.random.normal(kwf, (n_head * d_v, d_model), jnp.float32)
            * (1.0 / math.sqrt(n_head * d_v)))
    gamma = jnp.ones((d_model,), jnp.float32)
    beta = jnp.zeros((d_model,), jnp.float32)

    ref_out, ref_attn = reference_mha_np(q, k, v, w_qs, w_ks, w_vs, w_fc,
                                         gamma, beta,
                                         n_head=n_head, d_k=d_k, d_v=d_v)

    # Path 1: f32 compute, default (VMEM-budgeted) block_b, attention probs
    # returned.  Tolerance covers MXU multi-pass f32 matmul rounding at these
    # small contraction sizes.
    out, attn = vanilla_mha(q, k, v, w_qs, w_ks, w_vs, w_fc, gamma, beta,
                            n_head=n_head, d_k=d_k, d_v=d_v,
                            compute_dtype=jnp.float32)
    out = jax.block_until_ready(out)
    attn = jax.block_until_ready(attn)
    np.testing.assert_allclose(np.asarray(out, np.float64), ref_out,
                               rtol=1e-2, atol=1e-2)
    np.testing.assert_allclose(np.asarray(attn, np.float64), ref_attn,
                               rtol=1e-2, atol=1e-2)

    # Path 2: whole batch in one grid step, attention output skipped (the
    # biggest HBM/VMEM saving when the caller does not need the probabilities).
    out2 = vanilla_mha(q, k, v, w_qs, w_ks, w_vs, w_fc, gamma, beta,
                       n_head=n_head, d_k=d_k, d_v=d_v,
                       block_b=2, return_attn=False,
                       compute_dtype=jnp.float32)
    out2 = jax.block_until_ready(out2)
    np.testing.assert_allclose(np.asarray(out2, np.float64), ref_out,
                               rtol=1e-2, atol=1e-2)

    # Path 3: bf16 matmul operands with f32 accumulation (v6e/v7x MXU path),
    # one batch element per step -> 2 parallel batch blocks (v7x megacore).
    # Loose tolerance reflects the expected bf16 operand precision.
    out_bf, attn_bf = vanilla_mha(q, k, v, w_qs, w_ks, w_vs, w_fc, gamma, beta,
                                  n_head=n_head, d_k=d_k, d_v=d_v,
                                  block_b=1, compute_dtype=jnp.bfloat16,
                                  attn_dtype=jnp.float32)
    out_bf = jax.block_until_ready(out_bf)
    attn_bf = jax.block_until_ready(attn_bf)
    np.testing.assert_allclose(np.asarray(out_bf, np.float64), ref_out,
                               rtol=1e-1, atol=1e-1)
    np.testing.assert_allclose(np.asarray(attn_bf, np.float64), ref_attn,
                               rtol=1e-1, atol=1e-1)

    print("KERNEL_OK")
</pallas_src>

<mosaic_0001>
module attributes {stable_mosaic.version = 11 : i64} {
  func.func @_mha_kernel(%arg0: i32, %arg1: i32, %arg2: memref<1x8x32xf32, #tpu.memory_space<vmem>>, %arg3: memref<1x8x32xf32, #tpu.memory_space<vmem>>, %arg4: memref<1x8x32xf32, #tpu.memory_space<vmem>>, %arg5: memref<1x32x32xf32, #tpu.memory_space<vmem>>, %arg6: memref<1x32x32xf32, #tpu.memory_space<vmem>>, %arg7: memref<1x32x32xf32, #tpu.memory_space<vmem>>, %arg8: memref<1x32x32xf32, #tpu.memory_space<vmem>>, %arg9: memref<1x32xf32, #tpu.memory_space<vmem>>, %arg10: memref<1x32xf32, #tpu.memory_space<vmem>>, %arg11: memref<1x8x32xf32, #tpu.memory_space<vmem>>, %arg12: memref<1x4x8x8xf32, #tpu.memory_space<vmem>>) attributes {dimension_semantics = [#tpu.dimension_semantics<parallel>, #tpu.dimension_semantics<arbitrary>], iteration_bounds = array<i64: 2, 1>, scalar_prefetch = 0 : i64, scratch_operands = 0 : i64, tpu.core_type = #tpu.core_type<tc>, window_params = [{transform_indices = @transform_0, window_bounds = array<i64: 1, 8, 32>}, {transform_indices = @transform_1, window_bounds = array<i64: 1, 8, 32>}, {transform_indices = @transform_2, window_bounds = array<i64: 1, 8, 32>}, {pipeline_mode = #tpu.pipeline_mode<synchronous>, transform_indices = @transform_3, window_bounds = array<i64: 1, 32, 32>}, {pipeline_mode = #tpu.pipeline_mode<synchronous>, transform_indices = @transform_4, window_bounds = array<i64: 1, 32, 32>}, {pipeline_mode = #tpu.pipeline_mode<synchronous>, transform_indices = @transform_5, window_bounds = array<i64: 1, 32, 32>}, {pipeline_mode = #tpu.pipeline_mode<synchronous>, transform_indices = @transform_6, window_bounds = array<i64: 1, 32, 32>}, {pipeline_mode = #tpu.pipeline_mode<synchronous>, transform_indices = @transform_7, window_bounds = array<i64: 1, 32>}, {pipeline_mode = #tpu.pipeline_mode<synchronous>, transform_indices = @transform_8, window_bounds = array<i64: 1, 32>}, {transform_indices = @transform_9, window_bounds = array<i64: 1, 8, 32>}, {transform_indices = @transform_10, window_bounds = array<i64: 1, 4, 8, 8>}]} {
    %c0 = arith.constant 0 : index
    %c0_0 = arith.constant 0 : index
    %c0_1 = arith.constant 0 : index
    %0 = vector.load %arg2[%c0, %c0_0, %c0_1] : memref<1x8x32xf32, #tpu.memory_space<vmem>>, vector<1x8x32xf32>
    %1 = vector.shape_cast %0 : vector<1x8x32xf32> to vector<8x32xf32>
    %c0_2 = arith.constant 0 : index
    %c0_3 = arith.constant 0 : index
    %c0_4 = arith.constant 0 : index
    %2 = vector.load %arg3[%c0_2, %c0_3, %c0_4] : memref<1x8x32xf32, #tpu.memory_space<vmem>>, vector<1x8x32xf32>
    %3 = vector.shape_cast %2 : vector<1x8x32xf32> to vector<8x32xf32>
    %c0_5 = arith.constant 0 : index
    %c0_6 = arith.constant 0 : index
    %c0_7 = arith.constant 0 : index
    %4 = vector.load %arg4[%c0_5, %c0_6, %c0_7] : memref<1x8x32xf32, #tpu.memory_space<vmem>>, vector<1x8x32xf32>
    %5 = vector.shape_cast %4 : vector<1x8x32xf32> to vector<8x32xf32>
    %6 = arith.index_cast %arg1 : i32 to index
    %c0_8 = arith.constant 0 : index
    %c0_9 = arith.constant 0 : index
    %7 = vector.load %arg5[%6, %c0_8, %c0_9] : memref<1x32x32xf32, #tpu.memory_space<vmem>>, vector<1x32x32xf32>
    %8 = vector.shape_cast %7 : vector<1x32x32xf32> to vector<32x32xf32>
    %9 = arith.index_cast %arg1 : i32 to index
    %c0_10 = arith.constant 0 : index
    %c0_11 = arith.constant 0 : index
    %10 = vector.load %arg6[%9, %c0_10, %c0_11] : memref<1x32x32xf32, #tpu.memory_space<vmem>>, vector<1x32x32xf32>
    %11 = vector.shape_cast %10 : vector<1x32x32xf32> to vector<32x32xf32>
    %12 = arith.index_cast %arg1 : i32 to index
    %c0_12 = arith.constant 0 : index
    %c0_13 = arith.constant 0 : index
    %13 = vector.load %arg7[%12, %c0_12, %c0_13] : memref<1x32x32xf32, #tpu.memory_space<vmem>>, vector<1x32x32xf32>
    %14 = vector.shape_cast %13 : vector<1x32x32xf32> to vector<32x32xf32>
    %cst = arith.constant dense<0.000000e+00> : vector<8x32xf32>
    %15 = tpu.matmul %1, %8, %cst {dimension_numbers = #tpu.dot_dimension_numbers<[1], [0], [0], [1], [0, 0, 1, 1], [], []>} : vector<8x32xf32>, vector<32x32xf32>, vector<8x32xf32> -> vector<8x32xf32>
    %cst_14 = arith.constant dense<0.000000e+00> : vector<8x32xf32>
    %16 = tpu.matmul %3, %11, %cst_14 {dimension_numbers = #tpu.dot_dimension_numbers<[1], [0], [0], [1], [0, 0, 1, 1], [], []>} : vector<8x32xf32>, vector<32x32xf32>, vector<8x32xf32> -> vector<8x32xf32>
    %cst_15 = arith.constant dense<0.000000e+00> : vector<8x32xf32>
    %17 = tpu.matmul %5, %14, %cst_15 {dimension_numbers = #tpu.dot_dimension_numbers<[1], [0], [0], [1], [0, 0, 1, 1], [], []>} : vector<8x32xf32>, vector<32x32xf32>, vector<8x32xf32> -> vector<8x32xf32>
    %18 = vector.extract_strided_slice %15 {offsets = [0, 0], sizes = [8, 8], strides = [1, 1]} : vector<8x32xf32> to vector<8x8xf32>
    %19 = vector.shape_cast %18 : vector<8x8xf32> to vector<1x8x8xf32>
    %20 = vector.extract_strided_slice %16 {offsets = [0, 0], sizes = [8, 8], strides = [1, 1]} : vector<8x32xf32> to vector<8x8xf32>
    %21 = vector.shape_cast %20 : vector<8x8xf32> to vector<1x8x8xf32>
    %22 = vector.extract_strided_slice %17 {offsets = [0, 0], sizes = [8, 8], strides = [1, 1]} : vector<8x32xf32> to vector<8x8xf32>
    %23 = vector.shape_cast %22 : vector<8x8xf32> to vector<1x8x8xf32>
    "tpu.trace_start"() <{level = 10 : i32, message = "bqd,bkd->bqk"}> : () -> ()
    %cst_16 = arith.constant dense<0.000000e+00> : vector<1x8x8xf32>
    %24 = tpu.matmul %19, %21, %cst_16 {dimension_numbers = #tpu.dot_dimension_numbers<[2], [2], [1], [1], [0, 0, 0, 1, 1, 1], [0], [0]>} : vector<1x8x8xf32>, vector<1x8x8xf32>, vector<1x8x8xf32> -> vector<1x8x8xf32>
    "tpu.trace_stop"() : () -> ()
    %cst_17 = arith.constant dense<0xFF800000> : vector<1x8xf32>
    %25 = vector.multi_reduction <maximumf>, %24, %cst_17 [2] : vector<1x8x8xf32> to vector<1x8xf32>
    %26 = vector.shape_cast %25 : vector<1x8xf32> to vector<1x8x1xf32>
    %27 = vector.broadcast %26 : vector<1x8x1xf32> to vector<1x8x8xf32>
    %28 = arith.subf %24, %27 : vector<1x8x8xf32>
    %29 = math.exp %28 : vector<1x8x8xf32>
    %cst_18 = arith.constant dense<0.000000e+00> : vector<1x8xf32>
    %30 = vector.multi_reduction <add>, %29, %cst_18 [2] : vector<1x8x8xf32> to vector<1x8xf32>
    %31 = vector.shape_cast %30 : vector<1x8xf32> to vector<1x8x1xf32>
    %cst_19 = arith.constant 1.000000e+00 : f32
    %32 = vector.broadcast %cst_19 : f32 to vector<1x8x1xf32>
    %33 = arith.divf %32, %31 : vector<1x8x1xf32>
    %34 = vector.broadcast %33 : vector<1x8x1xf32> to vector<1x8x8xf32>
    %35 = arith.mulf %29, %34 : vector<1x8x8xf32>
    %36 = vector.shape_cast %35 : vector<1x8x8xf32> to vector<1x1x8x8xf32>
    %c0_20 = arith.constant 0 : index
    %c0_21 = arith.constant 0 : index
    %c0_22 = arith.constant 0 : index
    %c0_23 = arith.constant 0 : index
    %37 = vector.load %arg12[%c0_20, %c0_21, %c0_22, %c0_23] : memref<1x4x8x8xf32, #tpu.memory_space<vmem>>, vector<1x1x8x8xf32>
    tpu.vector_store %arg12[%c0_20, %c0_21, %c0_22, %c0_23], %36 {strides = array<i32>} : memref<1x4x8x8xf32, #tpu.memory_space<vmem>>, vector<1x1x8x8xf32>,
    "tpu.trace_start"() <{level = 10 : i32, message = "bqk,bkd->bqd"}> : () -> ()
    %cst_24 = arith.constant dense<0.000000e+00> : vector<1x8x8xf32>
    %38 = tpu.matmul %35, %23, %cst_24 {dimension_numbers = #tpu.dot_dimension_numbers<[2], [1], [1], [2], [0, 0, 0, 1, 1, 2], [0], [0]>} : vector<1x8x8xf32>, vector<1x8x8xf32>, vector<1x8x8xf32> -> vector<1x8x8xf32>
    "tpu.trace_stop"() : () -> ()
    %39 = vector.extract_strided_slice %15 {offsets = [0, 8], sizes = [8, 8], strides = [1, 1]} : vector<8x32xf32> to vector<8x8xf32>
    %40 = vector.shape_cast %39 : vector<8x8xf32> to vector<1x8x8xf32>
    %41 = vector.extract_strided_slice %16 {offsets = [0, 8], sizes = [8, 8], strides = [1, 1]} : vector<8x32xf32> to vector<8x8xf32>
    %42 = vector.shape_cast %41 : vector<8x8xf32> to vector<1x8x8xf32>
    %43 = vector.extract_strided_slice %17 {offsets = [0, 8], sizes = [8, 8], strides = [1, 1]} : vector<8x32xf32> to vector<8x8xf32>
    %44 = vector.shape_cast %43 : vector<8x8xf32> to vector<1x8x8xf32>
    "tpu.trace_start"() <{level = 10 : i32, message = "bqd,bkd->bqk"}> : () -> ()
    %cst_25 = arith.constant dense<0.000000e+00> : vector<1x8x8xf32>
    %45 = tpu.matmul %40, %42, %cst_25 {dimension_numbers = #tpu.dot_dimension_numbers<[2], [2], [1], [1], [0, 0, 0, 1, 1, 1], [0], [0]>} : vector<1x8x8xf32>, vector<1x8x8xf32>, vector<1x8x8xf32> -> vector<1x8x8xf32>
    "tpu.trace_stop"() : () -> ()
    %cst_26 = arith.constant dense<0xFF800000> : vector<1x8xf32>
    %46 = vector.multi_reduction <maximumf>, %45, %cst_26 [2] : vector<1x8x8xf32> to vector<1x8xf32>
    %47 = vector.shape_cast %46 : vector<1x8xf32> to vector<1x8x1xf32>
    %48 = vector.broadcast %47 : vector<1x8x1xf32> to vector<1x8x8xf32>
    %49 = arith.subf %45, %48 : vector<1x8x8xf32>
    %50 = math.exp %49 : vector<1x8x8xf32>
    %cst_27 = arith.constant dense<0.000000e+00> : vector<1x8xf32>
    %51 = vector.multi_reduction <add>, %50, %cst_27 [2] : vector<1x8x8xf32> to vector<1x8xf32>
    %52 = vector.shape_cast %51 : vector<1x8xf32> to vector<1x8x1xf32>
    %cst_28 = arith.constant 1.000000e+00 : f32
    %53 = vector.broadcast %cst_28 : f32 to vector<1x8x1xf32>
    %54 = arith.divf %53, %52 : vector<1x8x1xf32>
    %55 = vector.broadcast %54 : vector<1x8x1xf32> to vector<1x8x8xf32>
    %56 = arith.mulf %50, %55 : vector<1x8x8xf32>
    %57 = vector.shape_cast %56 : vector<1x8x8xf32> to vector<1x1x8x8xf32>
    %c0_29 = arith.constant 0 : index
    %c1 = arith.constant 1 : index
    %c0_30 = arith.constant 0 : index
    %c0_31 = arith.constant 0 : index
    %58 = vector.load %arg12[%c0_29, %c1, %c0_30, %c0_31] : memref<1x4x8x8xf32, #tpu.memory_space<vmem>>, vector<1x1x8x8xf32>
    tpu.vector_store %arg12[%c0_29, %c1, %c0_30, %c0_31], %57 {strides = array<i32>} : memref<1x4x8x8xf32, #tpu.memory_space<vmem>>, vector<1x1x8x8xf32>,
    "tpu.trace_start"() <{level = 10 : i32, message = "bqk,bkd->bqd"}> : () -> ()
    %cst_32 = arith.constant dense<0.000000e+00> : vector<1x8x8xf32>
    %59 = tpu.matmul %56, %44, %cst_32 {dimension_numbers = #tpu.dot_dimension_numbers<[2], [1], [1], [2], [0, 0, 0, 1, 1, 2], [0], [0]>} : vector<1x8x8xf32>, vector<1x8x8xf32>, vector<1x8x8xf32> -> vector<1x8x8xf32>
    "tpu.trace_stop"() : () -> ()
    %60 = vector.extract_strided_slice %15 {offsets = [0, 16], sizes = [8, 8], strides = [1, 1]} : vector<8x32xf32> to vector<8x8xf32>
    %61 = vector.shape_cast %60 : vector<8x8xf32> to vector<1x8x8xf32>
    %62 = vector.extract_strided_slice %16 {offsets = [0, 16], sizes = [8, 8], strides = [1, 1]} : vector<8x32xf32> to vector<8x8xf32>
    %63 = vector.shape_cast %62 : vector<8x8xf32> to vector<1x8x8xf32>
    %64 = vector.extract_strided_slice %17 {offsets = [0, 16], sizes = [8, 8], strides = [1, 1]} : vector<8x32xf32> to vector<8x8xf32>
    %65 = vector.shape_cast %64 : vector<8x8xf32> to vector<1x8x8xf32>
    "tpu.trace_start"() <{level = 10 : i32, message = "bqd,bkd->bqk"}> : () -> ()
    %cst_33 = arith.constant dense<0.000000e+00> : vector<1x8x8xf32>
    %66 = tpu.matmul %61, %63, %cst_33 {dimension_numbers = #tpu.dot_dimension_numbers<[2], [2], [1], [1], [0, 0, 0, 1, 1, 1], [0], [0]>} : vector<1x8x8xf32>, vector<1x8x8xf32>, vector<1x8x8xf32> -> vector<1x8x8xf32>
    "tpu.trace_stop"() : () -> ()
    %cst_34 = arith.constant dense<0xFF800000> : vector<1x8xf32>
    %67 = vector.multi_reduction <maximumf>, %66, %cst_34 [2] : vector<1x8x8xf32> to vector<1x8xf32>
    %68 = vector.shape_cast %67 : vector<1x8xf32> to vector<1x8x1xf32>
    %69 = vector.broadcast %68 : vector<1x8x1xf32> to vector<1x8x8xf32>
    %70 = arith.subf %66, %69 : vector<1x8x8xf32>
    %71 = math.exp %70 : vector<1x8x8xf32>
    %cst_35 = arith.constant dense<0.000000e+00> : vector<1x8xf32>
    %72 = vector.multi_reduction <add>, %71, %cst_35 [2] : vector<1x8x8xf32> to vector<1x8xf32>
    %73 = vector.shape_cast %72 : vector<1x8xf32> to vector<1x8x1xf32>
    %cst_36 = arith.constant 1.000000e+00 : f32
    %74 = vector.broadcast %cst_36 : f32 to vector<1x8x1xf32>
    %75 = arith.divf %74, %73 : vector<1x8x1xf32>
    %76 = vector.broadcast %75 : vector<1x8x1xf32> to vector<1x8x8xf32>
    %77 = arith.mulf %71, %76 : vector<1x8x8xf32>
    %78 = vector.shape_cast %77 : vector<1x8x8xf32> to vector<1x1x8x8xf32>
    %c0_37 = arith.constant 0 : index
    %c2 = arith.constant 2 : index
    %c0_38 = arith.constant 0 : index
    %c0_39 = arith.constant 0 : index
    %79 = vector.load %arg12[%c0_37, %c2, %c0_38, %c0_39] : memref<1x4x8x8xf32, #tpu.memory_space<vmem>>, vector<1x1x8x8xf32>
    tpu.vector_store %arg12[%c0_37, %c2, %c0_38, %c0_39], %78 {strides = array<i32>} : memref<1x4x8x8xf32, #tpu.memory_space<vmem>>, vector<1x1x8x8xf32>,
    "tpu.trace_start"() <{level = 10 : i32, message = "bqk,bkd->bqd"}> : () -> ()
    %cst_40 = arith.constant dense<0.000000e+00> : vector<1x8x8xf32>
    %80 = tpu.matmul %77, %65, %cst_40 {dimension_numbers = #tpu.dot_dimension_numbers<[2], [1], [1], [2], [0, 0, 0, 1, 1, 2], [0], [0]>} : vector<1x8x8xf32>, vector<1x8x8xf32>, vector<1x8x8xf32> -> vector<1x8x8xf32>
    "tpu.trace_stop"() : () -> ()
    %81 = vector.extract_strided_slice %15 {offsets = [0, 24], sizes = [8, 8], strides = [1, 1]} : vector<8x32xf32> to vector<8x8xf32>
    %82 = vector.shape_cast %81 : vector<8x8xf32> to vector<1x8x8xf32>
    %83 = vector.extract_strided_slice %16 {offsets = [0, 24], sizes = [8, 8], strides = [1, 1]} : vector<8x32xf32> to vector<8x8xf32>
    %84 = vector.shape_cast %83 : vector<8x8xf32> to vector<1x8x8xf32>
    %85 = vector.extract_strided_slice %17 {offsets = [0, 24], sizes = [8, 8], strides = [1, 1]} : vector<8x32xf32> to vector<8x8xf32>
    %86 = vector.shape_cast %85 : vector<8x8xf32> to vector<1x8x8xf32>
    "tpu.trace_start"() <{level = 10 : i32, message = "bqd,bkd->bqk"}> : () -> ()
    %cst_41 = arith.constant dense<0.000000e+00> : vector<1x8x8xf32>
    %87 = tpu.matmul %82, %84, %cst_41 {dimension_numbers = #tpu.dot_dimension_numbers<[2], [2], [1], [1], [0, 0, 0, 1, 1, 1], [0], [0]>} : vector<1x8x8xf32>, vector<1x8x8xf32>, vector<1x8x8xf32> -> vector<1x8x8xf32>
    "tpu.trace_stop"() : () -> ()
    %cst_42 = arith.constant dense<0xFF800000> : vector<1x8xf32>
    %88 = vector.multi_reduction <maximumf>, %87, %cst_42 [2] : vector<1x8x8xf32> to vector<1x8xf32>
    %89 = vector.shape_cast %88 : vector<1x8xf32> to vector<1x8x1xf32>
    %90 = vector.broadcast %89 : vector<1x8x1xf32> to vector<1x8x8xf32>
    %91 = arith.subf %87, %90 : vector<1x8x8xf32>
    %92 = math.exp %91 : vector<1x8x8xf32>
    %cst_43 = arith.constant dense<0.000000e+00> : vector<1x8xf32>
    %93 = vector.multi_reduction <add>, %92, %cst_43 [2] : vector<1x8x8xf32> to vector<1x8xf32>
    %94 = vector.shape_cast %93 : vector<1x8xf32> to vector<1x8x1xf32>
    %cst_44 = arith.constant 1.000000e+00 : f32
    %95 = vector.broadcast %cst_44 : f32 to vector<1x8x1xf32>
    %96 = arith.divf %95, %94 : vector<1x8x1xf32>
    %97 = vector.broadcast %96 : vector<1x8x1xf32> to vector<1x8x8xf32>
    %98 = arith.mulf %92, %97 : vector<1x8x8xf32>
    %99 = vector.shape_cast %98 : vector<1x8x8xf32> to vector<1x1x8x8xf32>
    %c0_45 = arith.constant 0 : index
    %c3 = arith.constant 3 : index
    %c0_46 = arith.constant 0 : index
    %c0_47 = arith.constant 0 : index
    %100 = vector.load %arg12[%c0_45, %c3, %c0_46, %c0_47] : memref<1x4x8x8xf32, #tpu.memory_space<vmem>>, vector<1x1x8x8xf32>
    tpu.vector_store %arg12[%c0_45, %c3, %c0_46, %c0_47], %99 {strides = array<i32>} : memref<1x4x8x8xf32, #tpu.memory_space<vmem>>, vector<1x1x8x8xf32>,
    "tpu.trace_start"() <{level = 10 : i32, message = "bqk,bkd->bqd"}> : () -> ()
    %cst_48 = arith.constant dense<0.000000e+00> : vector<1x8x8xf32>
    %101 = tpu.matmul %98, %86, %cst_48 {dimension_numbers = #tpu.dot_dimension_numbers<[2], [1], [1], [2], [0, 0, 0, 1, 1, 2], [0], [0]>} : vector<1x8x8xf32>, vector<1x8x8xf32>, vector<1x8x8xf32> -> vector<1x8x8xf32>
    "tpu.trace_stop"() : () -> ()
    %102 = tpu.concatenate %38, %59, %80, %101 in 2 : vector<1x8x8xf32>, vector<1x8x8xf32>, vector<1x8x8xf32>, vector<1x8x8xf32> -> vector<1x8x32xf32>
    %103 = vector.shape_cast %102 : vector<1x8x32xf32> to vector<8x32xf32>
    %104 = arith.index_cast %arg1 : i32 to index
    %c0_49 = arith.constant 0 : index
    %c0_50 = arith.constant 0 : index
    %105 = vector.load %arg8[%104, %c0_49, %c0_50] : memref<1x32x32xf32, #tpu.memory_space<vmem>>, vector<1x32x32xf32>
    %106 = vector.shape_cast %105 : vector<1x32x32xf32> to vector<32x32xf32>
    %cst_51 = arith.constant dense<0.000000e+00> : vector<8x32xf32>
    %107 = tpu.matmul %103, %106, %cst_51 {dimension_numbers = #tpu.dot_dimension_numbers<[1], [0], [0], [1], [0, 0, 1, 1], [], []>} : vector<8x32xf32>, vector<32x32xf32>, vector<8x32xf32> -> vector<8x32xf32>
    %108 = arith.addf %107, %1 : vector<8x32xf32>
    %cst_52 = arith.constant dense<0.000000e+00> : vector<8xf32>
    %109 = vector.multi_reduction <add>, %108, %cst_52 [1] : vector<8x32xf32> to vector<8xf32>
    %110 = vector.shape_cast %109 : vector<8xf32> to vector<8x1xf32>
    %cst_53 = arith.constant 3.200000e+01 : f32
    %111 = vector.broadcast %cst_53 : f32 to vector<8x1xf32>
    %112 = arith.divf %110, %111 : vector<8x1xf32>
    %113 = vector.broadcast %112 : vector<8x1xf32> to vector<8x32xf32>
    %114 = arith.subf %108, %113 : vector<8x32xf32>
    %115 = arith.mulf %114, %114 : vector<8x32xf32>
    %cst_54 = arith.constant dense<0.000000e+00> : vector<8xf32>
    %116 = vector.multi_reduction <add>, %115, %cst_54 [1] : vector<8x32xf32> to vector<8xf32>
    %117 = vector.shape_cast %116 : vector<8xf32> to vector<8x1xf32>
    %cst_55 = arith.constant 3.200000e+01 : f32
    %118 = vector.broadcast %cst_55 : f32 to vector<8x1xf32>
    %119 = arith.divf %117, %118 : vector<8x1xf32>
    %cst_56 = arith.constant 9.99999997E-7 : f32
    %120 = vector.broadcast %cst_56 : f32 to vector<8x1xf32>
    %121 = arith.addf %119, %120 : vector<8x1xf32>
    %122 = math.rsqrt %121 : vector<8x1xf32>
    %123 = vector.broadcast %122 : vector<8x1xf32> to vector<8x32xf32>
    %124 = arith.mulf %114, %123 : vector<8x32xf32>
    %c0_57 = arith.constant 0 : index
    %c0_58 = arith.constant 0 : index
    %125 = vector.load %arg9[%c0_57, %c0_58] : memref<1x32xf32, #tpu.memory_space<vmem>>, vector<1x32xf32>
    %126 = vector.broadcast %125 : vector<1x32xf32> to vector<8x32xf32>
    %127 = arith.mulf %124, %126 : vector<8x32xf32>
    %c0_59 = arith.constant 0 : index
    %c0_60 = arith.constant 0 : index
    %128 = vector.load %arg10[%c0_59, %c0_60] : memref<1x32xf32, #tpu.memory_space<vmem>>, vector<1x32xf32>
    %129 = vector.broadcast %128 : vector<1x32xf32> to vector<8x32xf32>
    %130 = arith.addf %127, %129 : vector<8x32xf32>
    %131 = vector.shape_cast %130 : vector<8x32xf32> to vector<1x8x32xf32>
    %c0_61 = arith.constant 0 : index
    %c0_62 = arith.constant 0 : index
    %c0_63 = arith.constant 0 : index
    %132 = vector.load %arg11[%c0_61, %c0_62, %c0_63] : memref<1x8x32xf32, #tpu.memory_space<vmem>>, vector<1x8x32xf32>
    tpu.vector_store %arg11[%c0_61, %c0_62, %c0_63], %131 {strides = array<i32>} : memref<1x8x32xf32, #tpu.memory_space<vmem>>, vector<1x8x32xf32>,
    return
  }
  func.func @transform_0(%arg0: i32, %arg1: i32) -> (i32, i32, i32) {
    %c0_i32 = arith.constant 0 : i32
    %c0_i32_0 = arith.constant 0 : i32
    %c0_i32_1 = arith.constant 0 : i32
    return %arg0, %c0_i32, %c0_i32_0 : i32, i32, i32
  }
  func.func @transform_1(%arg0: i32, %arg1: i32) -> (i32, i32, i32) {
    %c0_i32 = arith.constant 0 : i32
    %c0_i32_0 = arith.constant 0 : i32
    %c0_i32_1 = arith.constant 0 : i32
    return %arg0, %c0_i32, %c0_i32_0 : i32, i32, i32
  }
  func.func @transform_2(%arg0: i32, %arg1: i32) -> (i32, i32, i32) {
    %c0_i32 = arith.constant 0 : i32
    %c0_i32_0 = arith.constant 0 : i32
    %c0_i32_1 = arith.constant 0 : i32
    return %arg0, %c0_i32, %c0_i32_0 : i32, i32, i32
  }
  func.func @transform_3(%arg0: i32, %arg1: i32) -> (i32, i32, i32) {
    %c0_i32 = arith.constant 0 : i32
    %c0_i32_0 = arith.constant 0 : i32
    %c0_i32_1 = arith.constant 0 : i32
    %c0_i32_2 = arith.constant 0 : i32
    return %c0_i32, %c0_i32_0, %c0_i32_1 : i32, i32, i32
  }
  func.func @transform_4(%arg0: i32, %arg1: i32) -> (i32, i32, i32) {
    %c0_i32 = arith.constant 0 : i32
    %c0_i32_0 = arith.constant 0 : i32
    %c0_i32_1 = arith.constant 0 : i32
    %c0_i32_2 = arith.constant 0 : i32
    return %c0_i32, %c0_i32_0, %c0_i32_1 : i32, i32, i32
  }
  func.func @transform_5(%arg0: i32, %arg1: i32) -> (i32, i32, i32) {
    %c0_i32 = arith.constant 0 : i32
    %c0_i32_0 = arith.constant 0 : i32
    %c0_i32_1 = arith.constant 0 : i32
    %c0_i32_2 = arith.constant 0 : i32
    return %c0_i32, %c0_i32_0, %c0_i32_1 : i32, i32, i32
  }
  func.func @transform_6(%arg0: i32, %arg1: i32) -> (i32, i32, i32) {
    %c0_i32 = arith.constant 0 : i32
    %c0_i32_0 = arith.constant 0 : i32
    %c0_i32_1 = arith.constant 0 : i32
    %c0_i32_2 = arith.constant 0 : i32
    return %c0_i32, %c0_i32_0, %c0_i32_1 : i32, i32, i32
  }
  func.func @transform_7(%arg0: i32, %arg1: i32) -> (i32, i32) {
    %c0_i32 = arith.constant 0 : i32
    %c0_i32_0 = arith.constant 0 : i32
    %c0_i32_1 = arith.constant 0 : i32
    return %c0_i32, %c0_i32_0 : i32, i32
  }
  func.func @transform_8(%arg0: i32, %arg1: i32) -> (i32, i32) {
    %c0_i32 = arith.constant 0 : i32
    %c0_i32_0 = arith.constant 0 : i32
    %c0_i32_1 = arith.constant 0 : i32
    return %c0_i32, %c0_i32_0 : i32, i32
  }
  func.func @transform_9(%arg0: i32, %arg1: i32) -> (i32, i32, i32) {
    %c0_i32 = arith.constant 0 : i32
    %c0_i32_0 = arith.constant 0 : i32
    %c0_i32_1 = arith.constant 0 : i32
    return %arg0, %c0_i32, %c0_i32_0 : i32, i32, i32
  }
  func.func @transform_10(%arg0: i32, %arg1: i32) -> (i32, i32, i32, i32) {
    %c0_i32 = arith.constant 0 : i32
    %c0_i32_0 = arith.constant 0 : i32
    %c0_i32_1 = arith.constant 0 : i32
    return %arg0, %arg1, %c0_i32, %c0_i32_0 : i32, i32, i32, i32
  }
}

</mosaic_0001>

<llo_original>
// kernel: tpu_custom_call.1
$region0: #{tpu_custom_call.1}
  #allocation0 [shape = 'u32[]', space=smem, size = 0x4, offset = 0x4, fixed_abs, tag = 'smem constant byte address 0x4 - core index']
  #allocation1 [shape = 'u32[144,128]{1,0:T(1,128)}', space=vmem, size = 0x12000, scoped, tag = 'internal scratch']
  %s0 = inlined_call_operand.hbm [shape: f32[2,8,32], index: 0, kind: input, shape index: {}]
  %s1 = inlined_call_operand.hbm [shape: f32[2,8,32], index: 1, kind: input, shape index: {}]
  %s2 = inlined_call_operand.hbm [shape: f32[2,8,32], index: 2, kind: input, shape index: {}]
  %s3 = inlined_call_operand.hbm [shape: f32[1,32,32], index: 3, kind: input, shape index: {}]
  %s4 = inlined_call_operand.hbm [shape: f32[1,32,32], index: 4, kind: input, shape index: {}]
  %s5 = inlined_call_operand.hbm [shape: f32[1,32,32], index: 5, kind: input, shape index: {}]
  %s6 = inlined_call_operand.hbm [shape: f32[1,32,32], index: 6, kind: input, shape index: {}]
  %s7 = inlined_call_operand.hbm [shape: f32[1,32], index: 7, kind: input, shape index: {}]
  %s8 = inlined_call_operand.hbm [shape: f32[1,32], index: 8, kind: input, shape index: {}]
  %s9 = inlined_call_operand.hbm [shape: f32[2,8,32], index: 9, kind: output, shape index: {0}]
  %s10 = inlined_call_operand.hbm [shape: f32[2,4,8,8], index: 10, kind: output, shape index: {1}]
  %11 = xla_tuple %s9, %s10
  %s12 = sld [smem:[#allocation0]]
  $region113: #{tpu_custom_call.1} parent=0
    _
  %s14 = ssub.s32 1, %s12
  %s15 = scalar_select 0, %s14, %s12
  $region1: #{tpu_custom_call.1} parent=0
    #allocation2 [shape = 'u8[8192]{0}', space=vmem, size = 0x2000, scoped, tag = 'input window, operand 0']
    #allocation3 [shape = 's32[2]{0}', space=sflag, size = 0x8, scoped, tag = 'scoped memory for tpu_custom_call.1']
    #allocation4 [shape = 's32[2]{0}', space=sflag, size = 0x8, scoped, tag = 'scoped memory for tpu_custom_call.1']
    #allocation5 [shape = 'u8[8192]{0}', space=vmem, size = 0x2000, scoped, tag = 'input window, operand 1']
    #allocation6 [shape = 's32[2]{0}', space=sflag, size = 0x8, scoped, tag = 'scoped memory for tpu_custom_call.1']
    #allocation7 [shape = 'u8[8192]{0}', space=vmem, size = 0x2000, scoped, tag = 'input window, operand 2']
    #allocation8 [shape = 'u8[16384]{0}', space=vmem, size = 0x4000, scoped, tag = 'input window, operand 3, single buffered']
    #allocation9 [shape = 's32[1]{0}', space=sflag, size = 0x4, scoped, tag = 'scoped memory for tpu_custom_call.1']
    #allocation10 [shape = 'u8[16384]{0}', space=vmem, size = 0x4000, scoped, tag = 'input window, operand 4, single buffered']
    #allocation11 [shape = 'u8[16384]{0}', space=vmem, size = 0x4000, scoped, tag = 'input window, operand 5, single buffered']
    #allocation12 [shape = 's32[1]{0}', space=sflag, size = 0x4, scoped, tag = 'scoped memory for tpu_custom_call.1']
    #allocation13 [shape = 'u8[16384]{0}', space=vmem, size = 0x4000, scoped, tag = 'input window, operand 6, single buffered']
    #allocation14 [shape = 'u8[512]{0}', space=vmem, size = 0x400, scoped, tag = 'input window, operand 7, single buffered']
    #allocation15 [shape = 's32[1]{0}', space=sflag, size = 0x4, scoped, tag = 'scoped memory for tpu_custom_call.1']
    #allocation16 [shape = 'u8[512]{0}', space=vmem, size = 0x400, scoped, tag = 'input window, operand 8, single buffered']
    #allocation17 [shape = 'u8[8192]{0}', space=vmem, size = 0x2000, scoped, tag = 'output window, operand 0']
    #allocation18 [shape = 'u8[32768]{0}', space=vmem, size = 0x8000, scoped, tag = 'output window, operand 1']
    #allocation19 [shape = 's32[2]{0}', space=sflag, size = 0x8, scoped, tag = 'scoped memory for tpu_custom_call.1']
    %16 = vsyncpa [#allocation3], 0
    %s17 = scalar_lea.sflag [#allocation3], 1
    %18 = vsyncpa %s17, 0
    %19 = vsyncpa [#allocation6], 0
    %s20 = scalar_lea.sflag [#allocation6], 1
    %21 = vsyncpa %s20, 0
    %22 = vsyncpa [#allocation9], 0
    %23 = vsyncpa [#allocation12], 0
    %24 = vsyncpa [#allocation15], 0
    %25 = vsyncpa [#allocation4], 0
    %s26 = scalar_lea.sflag [#allocation4], 1
    %27 = vsyncpa %s26, 0
    %28 = vsyncpa [#allocation19], 0
    %s29 = scalar_lea.sflag [#allocation19], 1
    %30 = vsyncpa %s29, 0
    loop: start=0, step=1, limit=4
    $region2: #{tpu_custom_call.1} parent=1 // loop_pre_header
      _
    $region3: #{tpu_custom_call.1} parent=1 // loop_header
      %s32 = sphi 0, %s36
      %p33 = scmp.ge.s32.totalorder %s32, 4
      %s39 = sphi 0, %s51
      %s40 = sphi 0, %s47
      %s41 = sphi 0, %s39
      %s42 = sphi 0, %s40
      %s43 = sphi 0, %s41
      %s44 = sphi 0, %s42
      %s54 = sphi 0, %s56
      %s57 = sphi 0, %s54
      %s58 = sphi 0, %s57
      %s74 = sphi 0, %s58
      %s80 = sphi 0, %s82
      %s83 = sphi 0, %s80
      %s84 = sphi 0, %s83
      %s100 = sphi 0, %s84
      %s106 = sphi 0, %s108
      %s109 = sphi 0, %s106
      %s110 = sphi 0, %s109
      %s126 = sphi 0, %s110
      %s130 = sphi 0, %s130
      %s132 = sphi 0, %s130
      %s133 = sphi 0, %s132
      %s147 = sphi 0, %s133
      %s151 = sphi 0, %s151
      %s153 = sphi 0, %s151
      %s154 = sphi 0, %s153
      %s168 = sphi 0, %s154
      %s172 = sphi 0, %s172
      %s174 = sphi 0, %s172
      %s175 = sphi 0, %s174
      %s189 = sphi 0, %s175
      %s193 = sphi 0, %s193
      %s195 = sphi 0, %s193
      %s196 = sphi 0, %s195
      %s210 = sphi 0, %s196
      %s214 = sphi 0, %s214
      %s216 = sphi 0, %s214
      %s217 = sphi 0, %s216
      %s231 = sphi 0, %s217
      %s235 = sphi 0, %s235
      %s237 = sphi 0, %s235
      %s238 = sphi 0, %s237
      %s252 = sphi 0, %s238
      %s258 = sphi 0, %s260
      %s261 = sphi 0, %s258
      %s262 = sphi 0, %s261
      %s278 = sphi 0, %s262
      %s286 = sphi 0, %s288
      %s289 = sphi 0, %s286
      %s290 = sphi 0, %s289
      %s306 = sphi 0, %s290
    $region4: #{tpu_custom_call.1} parent=1 // loop_header_branch
      %35 = sbr.rel (%p33) target = $region8
    $region5: #{tpu_custom_call.1} parent=1 // loop_body
      %s37 = ssub.s32 %s32, 1
      %s38 = ssub.s32 %s32, 2
      %s45 = sadd.s32 1, %s40
      %p46 = scmp.ge.s32.totalorder %s45, 1
      %s47 = scalar_select %p46, 0, %s45
      %s48 = sadd.s32 1, %s39
      %s49 = scalar_select %p46, %s48, %s39
      %p50 = scmp.ge.s32.totalorder %s49, 2
      %s51 = scalar_select %p50, 0, %s49
      %s52 = ssub.s32 %s39, %s51
      %p53 = scmp.eq.s32.totalorder %s52, 0
      %s55 = sadd.s32 %s54, 1
      %s56 = scalar_select %p53, %s54, %s55
      %p59 = pneg %p53
      %p60 = scmp.eq.s32.totalorder %s32, 1
      %p61 = por %p59, %p60
      %p62 = scmp.ne.s32.totalorder %s54, %s57
      %p63 = scmp.eq.s32.totalorder %s32, 0
      %p64 = por %p62, %p63
      %p65 = scmp.ne.s32.totalorder %s54, %s57
      %p66 = scmp.eq.s32.totalorder %s37, 1
      %p67 = por %p65, %p66
      %p68 = scmp.ne.s32.totalorder %s57, %s58
      %p69 = scmp.eq.s32.totalorder %s37, 0
      %p70 = por %p68, %p69
      %p71 = scmp.ne.s32.totalorder %s57, %s58
      %p72 = scmp.eq.s32.totalorder %s38, 1
      %p73 = por %p71, %p72
      %p75 = scmp.ne.s32.totalorder %s58, %s74
      %p76 = scmp.eq.s32.totalorder %s38, 0
      %p77 = por %p75, %p76
      %s78 = ssub.s32 %s39, %s51
      %p79 = scmp.eq.s32.totalorder %s78, 0
      %s81 = sadd.s32 %s80, 1
      %s82 = scalar_select %p79, %s80, %s81
      %p85 = pneg %p79
      %p86 = scmp.eq.s32.totalorder %s32, 1
      %p87 = por %p85, %p86
      %p88 = scmp.ne.s32.totalorder %s80, %s83
      %p89 = scmp.eq.s32.totalorder %s32, 0
      %p90 = por %p88, %p89
      %p91 = scmp.ne.s32.totalorder %s80, %s83
      %p92 = scmp.eq.s32.totalorder %s37, 1
      %p93 = por %p91, %p92
      %p94 = scmp.ne.s32.totalorder %s83, %s84
      %p95 = scmp.eq.s32.totalorder %s37, 0
      %p96 = por %p94, %p95
      %p97 = scmp.ne.s32.totalorder %s83, %s84
      %p98 = scmp.eq.s32.totalorder %s38, 1
      %p99 = por %p97, %p98
      %p101 = scmp.ne.s32.totalorder %s84, %s100
      %p102 = scmp.eq.s32.totalorder %s38, 0
      %p103 = por %p101, %p102
      %s104 = ssub.s32 %s39, %s51
      %p105 = scmp.eq.s32.totalorder %s104, 0
      %s107 = sadd.s32 %s106, 1
      %s108 = scalar_select %p105, %s106, %s107
      %p111 = pneg %p105
      %p112 = scmp.eq.s32.totalorder %s32, 1
      %p113 = por %p111, %p112
      %p114 = scmp.ne.s32.totalorder %s106, %s109
      %p115 = scmp.eq.s32.totalorder %s32, 0
      %p116 = por %p114, %p115
      %p117 = scmp.ne.s32.totalorder %s106, %s109
      %p118 = scmp.eq.s32.totalorder %s37, 1
      %p119 = por %p117, %p118
      %p120 = scmp.ne.s32.totalorder %s109, %s110
      %p121 = scmp.eq.s32.totalorder %s37, 0
      %p122 = por %p120, %p121
      %p123 = scmp.ne.s32.totalorder %s109, %s110
      %p124 = scmp.eq.s32.totalorder %s38, 1
      %p125 = por %p123, %p124
      %p127 = scmp.ne.s32.totalorder %s110, %s126
      %p128 = scmp.eq.s32.totalorder %s38, 0
      %p129 = por %p127, %p128
      %s131 = sadd.s32 %s130, 1
      %p134 = scmp.eq.s32.totalorder %s32, 1
      %p135 = scmp.ne.s32.totalorder %s130, %s132
      %p136 = scmp.eq.s32.totalorder %s32, 0
      %p137 = por %p135, %p136
      %p138 = scmp.ne.s32.totalorder %s130, %s132
      %p139 = scmp.eq.s32.totalorder %s37, 1
      %p140 = por %p138, %p139
      %p141 = scmp.ne.s32.totalorder %s132, %s133
      %p142 = scmp.eq.s32.totalorder %s37, 0
      %p143 = por %p141, %p142
      %p144 = scmp.ne.s32.totalorder %s132, %s133
      %p145 = scmp.eq.s32.totalorder %s38, 1
      %p146 = por %p144, %p145
      %p148 = scmp.ne.s32.totalorder %s133, %s147
      %p149 = scmp.eq.s32.totalorder %s38, 0
      %p150 = por %p148, %p149
      %s152 = sadd.s32 %s151, 1
      %p155 = scmp.eq.s32.totalorder %s32, 1
      %p156 = scmp.ne.s32.totalorder %s151, %s153
      %p157 = scmp.eq.s32.totalorder %s32, 0
      %p158 = por %p156, %p157
      %p159 = scmp.ne.s32.totalorder %s151, %s153
      %p160 = scmp.eq.s32.totalorder %s37, 1
      %p161 = por %p159, %p160
      %p162 = scmp.ne.s32.totalorder %s153, %s154
      %p163 = scmp.eq.s32.totalorder %s37, 0
      %p164 = por %p162, %p163
      %p165 = scmp.ne.s32.totalorder %s153, %s154
      %p166 = scmp.eq.s32.totalorder %s38, 1
      %p167 = por %p165, %p166
      %p169 = scmp.ne.s32.totalorder %s154, %s168
      %p170 = scmp.eq.s32.totalorder %s38, 0
      %p171 = por %p169, %p170
      %s173 = sadd.s32 %s172, 1
      %p176 = scmp.eq.s32.totalorder %s32, 1
      %p177 = scmp.ne.s32.totalorder %s172, %s174
      %p178 = scmp.eq.s32.totalorder %s32, 0
      %p179 = por %p177, %p178
      %p180 = scmp.ne.s32.totalorder %s172, %s174
      %p181 = scmp.eq.s32.totalorder %s37, 1
      %p182 = por %p180, %p181
      %p183 = scmp.ne.s32.totalorder %s174, %s175
      %p184 = scmp.eq.s32.totalorder %s37, 0
      %p185 = por %p183, %p184
      %p186 = scmp.ne.s32.totalorder %s174, %s175
      %p187 = scmp.eq.s32.totalorder %s38, 1
      %p188 = por %p186, %p187
      %p190 = scmp.ne.s32.totalorder %s175, %s189
      %p191 = scmp.eq.s32.totalorder %s38, 0
      %p192 = por %p190, %p191
      %s194 = sadd.s32 %s193, 1
      %p197 = scmp.eq.s32.totalorder %s32, 1
      %p198 = scmp.ne.s32.totalorder %s193, %s195
      %p199 = scmp.eq.s32.totalorder %s32, 0
      %p200 = por %p198, %p199
      %p201 = scmp.ne.s32.totalorder %s193, %s195
      %p202 = scmp.eq.s32.totalorder %s37, 1
      %p203 = por %p201, %p202
      %p204 = scmp.ne.s32.totalorder %s195, %s196
      %p205 = scmp.eq.s32.totalorder %s37, 0
      %p206 = por %p204, %p205
      %p207 = scmp.ne.s32.totalorder %s195, %s196
      %p208 = scmp.eq.s32.totalorder %s38, 1
      %p209 = por %p207, %p208
      %p211 = scmp.ne.s32.totalorder %s196, %s210
      %p212 = scmp.eq.s32.totalorder %s38, 0
      %p213 = por %p211, %p212
      %s215 = sadd.s32 %s214, 1
      %p218 = scmp.eq.s32.totalorder %s32, 1
      %p219 = scmp.ne.s32.totalorder %s214, %s216
      %p220 = scmp.eq.s32.totalorder %s32, 0
      %p221 = por %p219, %p220
      %p222 = scmp.ne.s32.totalorder %s214, %s216
      %p223 = scmp.eq.s32.totalorder %s37, 1
      %p224 = por %p222, %p223
      %p225 = scmp.ne.s32.totalorder %s216, %s217
      %p226 = scmp.eq.s32.totalorder %s37, 0
      %p227 = por %p225, %p226
      %p228 = scmp.ne.s32.totalorder %s216, %s217
      %p229 = scmp.eq.s32.totalorder %s38, 1
      %p230 = por %p228, %p229
      %p232 = scmp.ne.s32.totalorder %s217, %s231
      %p233 = scmp.eq.s32.totalorder %s38, 0
      %p234 = por %p232, %p233
      %s236 = sadd.s32 %s235, 1
      %p239 = scmp.eq.s32.totalorder %s32, 1
      %p240 = scmp.ne.s32.totalorder %s235, %s237
      %p241 = scmp.eq.s32.totalorder %s32, 0
      %p242 = por %p240, %p241
      %p243 = scmp.ne.s32.totalorder %s235, %s237
      %p244 = scmp.eq.s32.totalorder %s37, 1
      %p245 = por %p243, %p244
      %p246 = scmp.ne.s32.totalorder %s237, %s238
      %p247 = scmp.eq.s32.totalorder %s37, 0
      %p248 = por %p246, %p247
      %p249 = scmp.ne.s32.totalorder %s237, %s238
      %p250 = scmp.eq.s32.totalorder %s38, 1
      %p251 = por %p249, %p250
      %p253 = scmp.ne.s32.totalorder %s238, %s252
      %p254 = scmp.eq.s32.totalorder %s38, 0
      %p255 = por %p253, %p254
      %s256 = ssub.s32 %s39, %s51
      %p257 = scmp.eq.s32.totalorder %s256, 0
      %s259 = sadd.s32 %s258, 1
      %s260 = scalar_select %p257, %s258, %s259
      %p263 = pneg %p257
      %p264 = scmp.eq.s32.totalorder %s32, 1
      %p265 = por %p263, %p264
      %p266 = scmp.ne.s32.totalorder %s258, %s261
      %p267 = scmp.eq.s32.totalorder %s32, 0
      %p268 = por %p266, %p267
      %p269 = scmp.ne.s32.totalorder %s258, %s261
      %p270 = scmp.eq.s32.totalorder %s37, 1
      %p271 = por %p269, %p270
      %p272 = scmp.ne.s32.totalorder %s261, %s262
      %p273 = scmp.eq.s32.totalorder %s37, 0
      %p274 = por %p272, %p273
      %p275 = scmp.ne.s32.totalorder %s261, %s262
      %p276 = scmp.eq.s32.totalorder %s38, 1
      %p277 = por %p275, %p276
      %p279 = scmp.ne.s32.totalorder %s262, %s278
      %p280 = scmp.eq.s32.totalorder %s38, 0
      %p281 = por %p279, %p280
      %s282 = ssub.s32 %s39, %s51
      %s283 = ssub.s32 %s40, %s47
      %s284 = sor.u32 %s282, %s283
      %p285 = scmp.eq.s32.totalorder %s284, 0
      %s287 = sadd.s32 %s286, 1
      %s288 = scalar_select %p285, %s286, %s287
      %p291 = pneg %p285
      %p292 = scmp.eq.s32.totalorder %s32, 1
      %p293 = por %p291, %p292
      %p294 = scmp.ne.s32.totalorder %s286, %s289
      %p295 = scmp.eq.s32.totalorder %s32, 0
      %p296 = por %p294, %p295
      %p297 = scmp.ne.s32.totalorder %s286, %s289
      %p298 = scmp.eq.s32.totalorder %s37, 1
      %p299 = por %p297, %p298
      %p300 = scmp.ne.s32.totalorder %s289, %s290
      %p301 = scmp.eq.s32.totalorder %s37, 0
      %p302 = por %p300, %p301
      %p303 = scmp.ne.s32.totalorder %s289, %s290
      %p304 = scmp.eq.s32.totalorder %s38, 1
      %p305 = por %p303, %p304
      %p307 = scmp.ne.s32.totalorder %s290, %s306
      %p308 = scmp.eq.s32.totalorder %s38, 0
      %p309 = por %p307, %p308
      %p310 = scmp.le.s32.totalorder 1, %s32
      %p311 = scmp.lt.s32.totalorder %s32, 3
      %p312 = pnand %p310, %p311
      %p313 = pneg %p312
      // Predicated region
      $region9: #{tpu_custom_call.1} parent=5 // pred_check
        _
      $region10: #{tpu_custom_call.1} parent=5 // pred_check_branch
        %315 = sbr.rel (%p312) target = $region12
      $region11: #{tpu_custom_call.1} parent=5 // pred_region
        %s316 = ssub.s32 %s32, 1
        // Predicated region
        $region13: #{tpu_custom_call.1} parent=11 // pred_check
          %p317 = pneg %p143
        $region14: #{tpu_custom_call.1} parent=11 // pred_check_branch
          %319 = sbr.rel (%p317) target = $region16
        $region15: #{tpu_custom_call.1} parent=11 // pred_region
          %s321 = ssub.s32 512, 512
          %322 = vsyncadd [#allocation9], %s321
          %s323 = sshll.u32 [#allocation8], 4
          %s324 = int_to_ptr.vmem [resolvable:$true] %s323
          %329 = dma.hbm_to_vmem [thread:$0]  %s3, 512, %s324, [#allocation9], 128, 128, 8
        $region16: #{tpu_custom_call.1} parent=11 // pred_fallthru
          _
        // Predicated region
        $region17: #{tpu_custom_call.1} parent=11 // pred_check
          %p330 = pneg %p164
        $region18: #{tpu_custom_call.1} parent=11 // pred_check_branch
          %332 = sbr.rel (%p330) target = $region20
        $region19: #{tpu_custom_call.1} parent=11 // pred_region
          %s334 = ssub.s32 512, 512
          %335 = vsyncadd [#allocation9], %s334
          %s336 = sshll.u32 [#allocation10], 4
          %s337 = int_to_ptr.vmem [resolvable:$true] %s336
          %342 = dma.hbm_to_vmem [thread:$0]  %s4, 512, %s337, [#allocation9], 128, 128, 8
        $region20: #{tpu_custom_call.1} parent=11 // pred_fallthru
          _
        // Predicated region
        $region21: #{tpu_custom_call.1} parent=11 // pred_check
          %p343 = pneg %p185
        $region22: #{tpu_custom_call.1} parent=11 // pred_check_branch
          %345 = sbr.rel (%p343) target = $region24
        $region23: #{tpu_custom_call.1} parent=11 // pred_region
          %s347 = ssub.s32 512, 512
          %348 = vsyncadd [#allocation12], %s347
          %s349 = sshll.u32 [#allocation11], 4
          %s350 = int_to_ptr.vmem [resolvable:$true] %s349
          %355 = dma.hbm_to_vmem [thread:$0]  %s5, 512, %s350, [#allocation12], 128, 128, 8
        $region24: #{tpu_custom_call.1} parent=11 // pred_fallthru
          _
        // Predicated region
        $region25: #{tpu_custom_call.1} parent=11 // pred_check
          %p356 = pneg %p206
        $region26: #{tpu_custom_call.1} parent=11 // pred_check_branch
          %358 = sbr.rel (%p356) target = $region28
        $region27: #{tpu_custom_call.1} parent=11 // pred_region
          %s360 = ssub.s32 512, 512
          %361 = vsyncadd [#allocation12], %s360
          %s362 = sshll.u32 [#allocation13], 4
          %s363 = int_to_ptr.vmem [resolvable:$true] %s362
          %368 = dma.hbm_to_vmem [thread:$0]  %s6, 512, %s363, [#allocation12], 128, 128, 8
        $region28: #{tpu_custom_call.1} parent=11 // pred_fallthru
          _
        // Predicated region
        $region29: #{tpu_custom_call.1} parent=11 // pred_check
          %p369 = pneg %p227
        $region30: #{tpu_custom_call.1} parent=11 // pred_check_branch
          %371 = sbr.rel (%p369) target = $region32
        $region31: #{tpu_custom_call.1} parent=11 // pred_region
          %s373 = ssub.s32 16, 16
          %374 = vsyncadd [#allocation15], %s373
          %s376 = sshll.u32 [#allocation14], 4
          %s377 = int_to_ptr.vmem [resolvable:$true] %s376
          %379 = dma.hbm_to_vmem [thread:$0]  %s7, 16, %s377, [#allocation15]
        $region32: #{tpu_custom_call.1} parent=11 // pred_fallthru
          _
        // Predicated region
        $region33: #{tpu_custom_call.1} parent=11 // pred_check
          %p380 = pneg %p248
        $region34: #{tpu_custom_call.1} parent=11 // pred_check_branch
          %382 = sbr.rel (%p380) target = $region36
        $region35: #{tpu_custom_call.1} parent=11 // pred_region
          %s384 = ssub.s32 16, 16
          %385 = vsyncadd [#allocation15], %s384
          %s387 = sshll.u32 [#allocation16], 4
          %s388 = int_to_ptr.vmem [resolvable:$true] %s387
          %390 = dma.hbm_to_vmem [thread:$0]  %s8, 16, %s388, [#allocation15]
        $region36: #{tpu_custom_call.1} parent=11 // pred_fallthru
          _
      $region12: #{tpu_custom_call.1} parent=5 // pred_fallthru
        _
      %p391 = scmp.lt.s32.totalorder %s32, 2
      // Predicated region
      $region37: #{tpu_custom_call.1} parent=5 // pred_check
        %p392 = pneg %p391
      $region38: #{tpu_custom_call.1} parent=5 // pred_check_branch
        %394 = sbr.rel (%p392) target = $region40
      $region39: #{tpu_custom_call.1} parent=5 // pred_region
        // Predicated region
        $region41: #{tpu_custom_call.1} parent=39 // pred_check
          %p395 = pneg %p64
        $region42: #{tpu_custom_call.1} parent=39 // pred_check_branch
          %397 = sbr.rel (%p395) target = $region44
        $region43: #{tpu_custom_call.1} parent=39 // pred_region
          %s398 = sand.u32 %s54, 1
          %s399 = scalar_lea.sflag [#allocation3], %s398
          %s400 = sand.u32 %s54, 1
          %s401 = smul.addr %s400, 8
          %s402 = scalar_lea.vmem [#allocation2], %s401
          %s404 = ssub.s32 128, 128
          %405 = vsyncadd %s399, %s404
          %s406 = smul.addr %s39, 128
          %s407 = scalar_lea.hbm %s0, %s406
          %s409 = sshll.u32 %s402, 4
          %s410 = int_to_ptr.vmem [resolvable:$true] %s409
          %412 = dma.hbm_to_vmem [thread:$0]  %s407, 128, %s410, %s399
        $region44: #{tpu_custom_call.1} parent=39 // pred_fallthru
          _
        // Predicated region
        $region45: #{tpu_custom_call.1} parent=39 // pred_check
          %p413 = pneg %p90
        $region46: #{tpu_custom_call.1} parent=39 // pred_check_branch
          %415 = sbr.rel (%p413) target = $region48
        $region47: #{tpu_custom_call.1} parent=39 // pred_region
          %s416 = sand.u32 %s32, 1
          %s417 = scalar_lea.sflag [#allocation6], %s416
          %s418 = sand.u32 %s80, 1
          %s419 = smul.addr %s418, 8
          %s420 = scalar_lea.vmem [#allocation5], %s419
          %s422 = ssub.s32 128, 128
          %423 = vsyncadd %s417, %s422
          %s424 = smul.addr %s39, 128
          %s425 = scalar_lea.hbm %s1, %s424
          %s427 = sshll.u32 %s420, 4
          %s428 = int_to_ptr.vmem [resolvable:$true] %s427
          %430 = dma.hbm_to_vmem [thread:$0]  %s425, 128, %s428, %s417
        $region48: #{tpu_custom_call.1} parent=39 // pred_fallthru
          _
        // Predicated region
        $region49: #{tpu_custom_call.1} parent=39 // pred_check
          %p431 = pneg %p116
        $region50: #{tpu_custom_call.1} parent=39 // pred_check_branch
          %433 = sbr.rel (%p431) target = $region52
        $region51: #{tpu_custom_call.1} parent=39 // pred_region
          %s434 = sand.u32 %s32, 1
          %s435 = scalar_lea.sflag [#allocation6], %s434
          %s436 = sand.u32 %s106, 1
          %s437 = smul.addr %s436, 8
          %s438 = scalar_lea.vmem [#allocation7], %s437
          %s440 = ssub.s32 128, 128
          %441 = vsyncadd %s435, %s440
          %s442 = smul.addr %s39, 128
          %s443 = scalar_lea.hbm %s2, %s442
          %s445 = sshll.u32 %s438, 4
          %s446 = int_to_ptr.vmem [resolvable:$true] %s445
          %448 = dma.hbm_to_vmem [thread:$0]  %s443, 128, %s446, %s435
        $region52: #{tpu_custom_call.1} parent=39 // pred_fallthru
          _
      $region40: #{tpu_custom_call.1} parent=5 // pred_fallthru
        _
      %p449 = scmp.le.s32.totalorder 1, %s32
      %p450 = scmp.lt.s32.totalorder %s32, 3
      %p451 = pnand %p449, %p450
      %p452 = pneg %p451
      // Predicated region
      $region53: #{tpu_custom_call.1} parent=5 // pred_check
        _
      $region54: #{tpu_custom_call.1} parent=5 // pred_check_branch
        %454 = sbr.rel (%p451) target = $region56
      $region55: #{tpu_custom_call.1} parent=5 // pred_region
        %s455 = ssub.s32 %s32, 1
        %s456 = sand.u32 %s57, 1
        %s457 = scalar_lea.sflag [#allocation3], %s456
        %s458 = sand.u32 %s57, 1
        %s459 = smul.addr %s458, 8
        %s460 = scalar_lea.vmem [#allocation2], %s459
        // Predicated region
        $region57: #{tpu_custom_call.1} parent=55 // pred_check
          %p461 = pneg %p70
        $region58: #{tpu_custom_call.1} parent=55 // pred_check_branch
          %463 = sbr.rel (%p461) target = $region60
        $region59: #{tpu_custom_call.1} parent=55 // pred_region
          %464 = dma.done %s457, 128
        $region60: #{tpu_custom_call.1} parent=55 // pred_fallthru
          _
        %s465 = sand.u32 %s37, 1
        %s466 = scalar_lea.sflag [#allocation6], %s465
        %s467 = sand.u32 %s83, 1
        %s468 = smul.addr %s467, 8
        %s469 = scalar_lea.vmem [#allocation5], %s468
        // Predicated region
        $region61: #{tpu_custom_call.1} parent=55 // pred_check
          %p470 = pneg %p96
        $region62: #{tpu_custom_call.1} parent=55 // pred_check_branch
          %472 = sbr.rel (%p470) target = $region64
        $region63: #{tpu_custom_call.1} parent=55 // pred_region
          %473 = dma.done %s466, 128
        $region64: #{tpu_custom_call.1} parent=55 // pred_fallthru
          _
        %s474 = sand.u32 %s37, 1
        %s475 = scalar_lea.sflag [#allocation6], %s474
        %s476 = sand.u32 %s109, 1
        %s477 = smul.addr %s476, 8
        %s478 = scalar_lea.vmem [#allocation7], %s477
        // Predicated region
        $region65: #{tpu_custom_call.1} parent=55 // pred_check
          %p479 = pneg %p122
        $region66: #{tpu_custom_call.1} parent=55 // pred_check_branch
          %481 = sbr.rel (%p479) target = $region68
        $region67: #{tpu_custom_call.1} parent=55 // pred_region
          %482 = dma.done %s475, 128
        $region68: #{tpu_custom_call.1} parent=55 // pred_fallthru
          _
        // Predicated region
        $region69: #{tpu_custom_call.1} parent=55 // pred_check
          %p483 = pneg %p143
        $region70: #{tpu_custom_call.1} parent=55 // pred_check_branch
          %485 = sbr.rel (%p483) target = $region72
        $region71: #{tpu_custom_call.1} parent=55 // pred_region
          %486 = dma.done [#allocation9], 512
        $region72: #{tpu_custom_call.1} parent=55 // pred_fallthru
          _
        // Predicated region
        $region73: #{tpu_custom_call.1} parent=55 // pred_check
          %p487 = pneg %p164
        $region74: #{tpu_custom_call.1} parent=55 // pred_check_branch
          %489 = sbr.rel (%p487) target = $region76
        $region75: #{tpu_custom_call.1} parent=55 // pred_region
          %490 = dma.done [#allocation9], 512
        $region76: #{tpu_custom_call.1} parent=55 // pred_fallthru
          _
        // Predicated region
        $region77: #{tpu_custom_call.1} parent=55 // pred_check
          %p491 = pneg %p185
        $region78: #{tpu_custom_call.1} parent=55 // pred_check_branch
          %493 = sbr.rel (%p491) target = $region80
        $region79: #{tpu_custom_call.1} parent=55 // pred_region
          %494 = dma.done [#allocation12], 512
        $region80: #{tpu_custom_call.1} parent=55 // pred_fallthru
          _
        // Predicated region
        $region81: #{tpu_custom_call.1} parent=55 // pred_check
          %p495 = pneg %p206
        $region82: #{tpu_custom_call.1} parent=55 // pred_check_branch
          %497 = sbr.rel (%p495) target = $region84
        $region83: #{tpu_custom_call.1} parent=55 // pred_region
          %498 = dma.done [#allocation12], 512
        $region84: #{tpu_custom_call.1} parent=55 // pred_fallthru
          _
        // Predicated region
        $region85: #{tpu_custom_call.1} parent=55 // pred_check
          %p499 = pneg %p227
        $region86: #{tpu_custom_call.1} parent=55 // pred_check_branch
          %501 = sbr.rel (%p499) target = $region88
        $region87: #{tpu_custom_call.1} parent=55 // pred_region
          %502 = dma.done [#allocation15], 16
        $region88: #{tpu_custom_call.1} parent=55 // pred_fallthru
          _
        // Predicated region
        $region89: #{tpu_custom_call.1} parent=55 // pred_check
          %p503 = pneg %p248
        $region90: #{tpu_custom_call.1} parent=55 // pred_check_branch
          %505 = sbr.rel (%p503) target = $region92
        $region91: #{tpu_custom_call.1} parent=55 // pred_region
          %506 = dma.done [#allocation15], 16
        $region92: #{tpu_custom_call.1} parent=55 // pred_fallthru
          _
        %s507 = sand.u32 %s57, 1
        %s508 = scalar_lea.sflag [#allocation3], %s507
        %s509 = sand.u32 %s57, 1
        %s510 = smul.addr %s509, 8
        %s511 = scalar_lea.vmem [#allocation2], %s510
        %p512 = pneg %p70
        %p513 = pneg %p67
        %s514 = sand.u32 %s37, 1
        %s515 = scalar_lea.sflag [#allocation6], %s514
        %s516 = sand.u32 %s83, 1
        %s517 = smul.addr %s516, 8
        %s518 = scalar_lea.vmem [#allocation5], %s517
        %p519 = pneg %p96
        %p520 = pneg %p93
        %s521 = sand.u32 %s37, 1
        %s522 = scalar_lea.sflag [#allocation6], %s521
        %s523 = sand.u32 %s109, 1
        %s524 = smul.addr %s523, 8
        %s525 = scalar_lea.vmem [#allocation7], %s524
        %p526 = pneg %p122
        %p527 = pneg %p119
        %p528 = pneg %p143
        %p529 = pneg %p140
        %p530 = pneg %p164
        %p531 = pneg %p161
        %p532 = pneg %p185
        %p533 = pneg %p182
        %p534 = pneg %p206
        %p535 = pneg %p203
        %p536 = pneg %p227
        %p537 = pneg %p224
        %p538 = pneg %p248
        %p539 = pneg %p245
        %p540 = pneg %p274
        %p541 = pneg %p271
        %s542 = sand.u32 %s261, 1
        %s543 = scalar_lea.sflag [#allocation4], %s542
        %s544 = sand.u32 %s261, 1
        %s545 = smul.addr %s544, 8
        %s546 = scalar_lea.vmem [#allocation17], %s545
        %p547 = pneg %p302
        %p548 = pneg %p299
        %s549 = sand.u32 %s289, 1
        %s550 = scalar_lea.sflag [#allocation19], %s549
        %s551 = sand.u32 %s289, 1
        %s552 = smul.addr %s551, 32
        %s553 = scalar_lea.vmem [#allocation18], %s552
        %s554 = smul.u32 4, %s42
        %v555 = vld [vmem:[%s460] sm:$0xff]
        %v556 = vld [vmem:[%s469] sm:$0xff]
        %v557 = vld [vmem:[%s478] sm:$0xff]
        %s558 = smul.u32 %s42, 32
        %s559 = scalar_lea.vmem [#allocation8], %s558
        %v560 = vld [vmem:[%s559] sm:$0xff]
        %v561 = vld [vmem:[%s559 + $0x8] sm:$0xff]
        %v562 = vld [vmem:[%s559 + $0x10] sm:$0xff]
        %v563 = vld [vmem:[%s559 + $0x18] sm:$0xff]
        %s564 = scalar_lea.vmem [#allocation10], %s558
        %v565 = vld [vmem:[%s564] sm:$0xff]
        %v566 = vld [vmem:[%s564 + $0x8] sm:$0xff]
        %v567 = vld [vmem:[%s564 + $0x10] sm:$0xff]
        %v568 = vld [vmem:[%s564 + $0x18] sm:$0xff]
        %s569 = scalar_lea.vmem [#allocation11], %s558
        %v570 = vld [vmem:[%s569] sm:$0xff]
        %v571 = vld [vmem:[%s569 + $0x8] sm:$0xff]
        %v572 = vld [vmem:[%s569 + $0x10] sm:$0xff]
        %v573 = vld [vmem:[%s569 + $0x18] sm:$0xff]
        %vm574 = vcmask 261120
        %v576 = vsel %vm574, %v555, 0
        %578 = vmatprep.subr.mxu0 0.0
        %579 = vmatpush1.msra.mxu0 %v560
        %580 = vmatprep.subr.mxu0 0.0
        %581 = vmatpush1.msra.mxu0 %v561
        %582 = vmatprep.subr.mxu0 0.0
        %583 = vmatpush1.msra.mxu0 %v562
        %584 = vmatprep.subr.mxu0 0.0
        %585 = vmatpush1.msra.mxu0 %v563
        %586 = vmatprep.subr.mxu0 0.0
        %587 = vmatpush1.msra.mxu0 0.0
        %588 = vmatprep.subr.mxu0 0.0
        %589 = vmatpush1.msra.mxu0 0.0
        %590 = vmatprep.subr.mxu0 0.0
        %591 = vmatpush1.msra.mxu0 0.0
        %592 = vmatprep.subr.mxu0 0.0
        %593 = vmatpush1.msra.mxu0 0.0
        %594 = vmatprep.subr.mxu0 0.0
        %595 = vmatpush1.msra.mxu0 0.0
        %596 = vmatprep.subr.mxu0 0.0
        %597 = vmatpush1.msra.mxu0 0.0
        %598 = vmatprep.subr.mxu0 0.0
        %599 = vmatpush1.msra.mxu0 0.0
        %600 = vmatprep.subr.mxu0 0.0
        %601 = vmatpush1.msra.mxu0 0.0
        %602 = vmatprep.subr.mxu0 0.0
        %603 = vmatpush1.msra.mxu0 0.0
        %604 = vmatprep.subr.mxu0 0.0
        %605 = vmatpush1.msra.mxu0 0.0
        %606 = vmatprep.subr.mxu0 0.0
        %607 = vmatpush1.msra.mxu0 0.0
        %608 = vmatprep.subr.mxu0 0.0
        %609 = vmatpush1.msra.mxu0 0.0
        %610 = vmatprep.subr.mxu0 0.0
        %611 = vmatpush1.msra.mxu0 0.0
        %612 = vmatprep.subr.mxu0 0.0
        %613 = vmatpush1.msra.mxu0 0.0
        %614 = vmatprep.subr.mxu0 0.0
        %615 = vmatpush1.msra.mxu0 0.0
        %616 = vmatprep.subr.mxu0 0.0
        %617 = vmatpush1.msra.mxu0 0.0
        %618 = vmatprep.subr.mxu0 0.0
        %619 = vmatpush1.msra.mxu0 0.0
        %620 = vmatprep.subr.mxu0 0.0
        %621 = vmatpush1.msra.mxu0 0.0
        %622 = vmatprep.subr.mxu0 0.0
        %623 = vmatpush1.msra.mxu0 0.0
        %624 = vmatprep.subr.mxu0 0.0
        %625 = vmatpush1.msra.mxu0 0.0
        %626 = vmatprep.subr.mxu0 0.0
        %627 = vmatpush1.msra.mxu0 0.0
        %628 = vmatprep.subr.mxu0 0.0
        %629 = vmatpush1.msra.mxu0 0.0
        %630 = vmatprep.subr.mxu0 0.0
        %631 = vmatpush1.msra.mxu0 0.0
        %632 = vmatprep.subr.mxu0 0.0
        %633 = vmatpush1.msra.mxu0 0.0
        %634 = vmatprep.subr.mxu0 0.0
        %635 = vmatpush1.msra.mxu0 0.0
        %636 = vmatprep.subr.mxu0 0.0
        %637 = vmatpush1.msra.mxu0 0.0
        %638 = vmatprep.subr.mxu0 0.0
        %639 = vmatpush1.msra.mxu0 0.0
        %640 = vmatprep.subr.mxu0 0.0
        %641 = vmatpush1.msra.mxu0 0.0
        %642 = vmatprep.mubr.f32.mxu0 0.0
        %643 = vmatmul.mubr.f32.gmra.mrb[0].mxu0 %v576
        %v644 = vpop.f32.mrb[0].mxu0
        %v645 = vadd.f32 0.0, %v644
        %v646 = vpop.f32.mrb[0].mxu0
        %647 = vdwg.mxu0
        %v649 = vsel %vm574, %v556, 0
        %651 = vmatprep.subr.mxu0 0.0
        %652 = vmatpush1.msra.mxu0 %v565
        %653 = vmatprep.subr.mxu0 0.0
        %654 = vmatpush1.msra.mxu0 %v566
        %655 = vmatprep.subr.mxu0 0.0
        %656 = vmatpush1.msra.mxu0 %v567
        %657 = vmatprep.subr.mxu0 0.0
        %658 = vmatpush1.msra.mxu0 %v568
        %659 = vmatprep.subr.mxu0 0.0
        %660 = vmatpush1.msra.mxu0 0.0
        %661 = vmatprep.subr.mxu0 0.0
        %662 = vmatpush1.msra.mxu0 0.0
        %663 = vmatprep.subr.mxu0 0.0
        %664 = vmatpush1.msra.mxu0 0.0
        %665 = vmatprep.subr.mxu0 0.0
        %666 = vmatpush1.msra.mxu0 0.0
        %667 = vmatprep.subr.mxu0 0.0
        %668 = vmatpush1.msra.mxu0 0.0
        %669 = vmatprep.subr.mxu0 0.0
        %670 = vmatpush1.msra.mxu0 0.0
        %671 = vmatprep.subr.mxu0 0.0
        %672 = vmatpush1.msra.mxu0 0.0
        %673 = vmatprep.subr.mxu0 0.0
        %674 = vmatpush1.msra.mxu0 0.0
        %675 = vmatprep.subr.mxu0 0.0
        %676 = vmatpush1.msra.mxu0 0.0
        %677 = vmatprep.subr.mxu0 0.0
        %678 = vmatpush1.msra.mxu0 0.0
        %679 = vmatprep.subr.mxu0 0.0
        %680 = vmatpush1.msra.mxu0 0.0
        %681 = vmatprep.subr.mxu0 0.0
        %682 = vmatpush1.msra.mxu0 0.0
        %683 = vmatprep.subr.mxu0 0.0
        %684 = vmatpush1.msra.mxu0 0.0
        %685 = vmatprep.subr.mxu0 0.0
        %686 = vmatpush1.msra.mxu0 0.0
        %687 = vmatprep.subr.mxu0 0.0
        %688 = vmatpush1.msra.mxu0 0.0
        %689 = vmatprep.subr.mxu0 0.0
        %690 = vmatpush1.msra.mxu0 0.0
        %691 = vmatprep.subr.mxu0 0.0
        %692 = vmatpush1.msra.mxu0 0.0
        %693 = vmatprep.subr.mxu0 0.0
        %694 = vmatpush1.msra.mxu0 0.0
        %695 = vmatprep.subr.mxu0 0.0
        %696 = vmatpush1.msra.mxu0 0.0
        %697 = vmatprep.subr.mxu0 0.0
        %698 = vmatpush1.msra.mxu0 0.0
        %699 = vmatprep.subr.mxu0 0.0
        %700 = vmatpush1.msra.mxu0 0.0
        %701 = vmatprep.subr.mxu0 0.0
        %702 = vmatpush1.msra.mxu0 0.0
        %703 = vmatprep.subr.mxu0 0.0
        %704 = vmatpush1.msra.mxu0 0.0
        %705 = vmatprep.subr.mxu0 0.0
        %706 = vmatpush1.msra.mxu0 0.0
        %707 = vmatprep.subr.mxu0 0.0
        %708 = vmatpush1.msra.mxu0 0.0
        %709 = vmatprep.subr.mxu0 0.0
        %710 = vmatpush1.msra.mxu0 0.0
        %711 = vmatprep.subr.mxu0 0.0
        %712 = vmatpush1.msra.mxu0 0.0
        %713 = vmatprep.subr.mxu0 0.0
        %714 = vmatpush1.msra.mxu0 0.0
        %715 = vmatprep.mubr.f32.mxu0 0.0
        %716 = vmatmul.mubr.f32.gmra.mrb[0].mxu0 %v649
        %v717 = vpop.f32.mrb[0].mxu0
        %v718 = vadd.f32 0.0, %v717
        %v719 = vpop.f32.mrb[0].mxu0
        %720 = vdwg.mxu0
        %v722 = vsel %vm574, %v557, 0
        %724 = vmatprep.subr.mxu0 0.0
        %725 = vmatpush1.msra.mxu0 %v570
        %726 = vmatprep.subr.mxu0 0.0
        %727 = vmatpush1.msra.mxu0 %v571
        %728 = vmatprep.subr.mxu0 0.0
        %729 = vmatpush1.msra.mxu0 %v572
        %730 = vmatprep.subr.mxu0 0.0
        %731 = vmatpush1.msra.mxu0 %v573
        %732 = vmatprep.subr.mxu0 0.0
        %733 = vmatpush1.msra.mxu0 0.0
        %734 = vmatprep.subr.mxu0 0.0
        %735 = vmatpush1.msra.mxu0 0.0
        %736 = vmatprep.subr.mxu0 0.0
        %737 = vmatpush1.msra.mxu0 0.0
        %738 = vmatprep.subr.mxu0 0.0
        %739 = vmatpush1.msra.mxu0 0.0
        %740 = vmatprep.subr.mxu0 0.0
        %741 = vmatpush1.msra.mxu0 0.0
        %742 = vmatprep.subr.mxu0 0.0
        %743 = vmatpush1.msra.mxu0 0.0
        %744 = vmatprep.subr.mxu0 0.0
        %745 = vmatpush1.msra.mxu0 0.0
        %746 = vmatprep.subr.mxu0 0.0
        %747 = vmatpush1.msra.mxu0 0.0
        %748 = vmatprep.subr.mxu0 0.0
        %749 = vmatpush1.msra.mxu0 0.0
        %750 = vmatprep.subr.mxu0 0.0
        %751 = vmatpush1.msra.mxu0 0.0
        %752 = vmatprep.subr.mxu0 0.0
        %753 = vmatpush1.msra.mxu0 0.0
        %754 = vmatprep.subr.mxu0 0.0
        %755 = vmatpush1.msra.mxu0 0.0
        %756 = vmatprep.subr.mxu0 0.0
        %757 = vmatpush1.msra.mxu0 0.0
        %758 = vmatprep.subr.mxu0 0.0
        %759 = vmatpush1.msra.mxu0 0.0
        %760 = vmatprep.subr.mxu0 0.0
        %761 = vmatpush1.msra.mxu0 0.0
        %762 = vmatprep.subr.mxu0 0.0
        %763 = vmatpush1.msra.mxu0 0.0
        %764 = vmatprep.subr.mxu0 0.0
        %765 = vmatpush1.msra.mxu0 0.0
        %766 = vmatprep.subr.mxu0 0.0
        %767 = vmatpush1.msra.mxu0 0.0
        %768 = vmatprep.subr.mxu0 0.0
        %769 = vmatpush1.msra.mxu0 0.0
        %770 = vmatprep.subr.mxu0 0.0
        %771 = vmatpush1.msra.mxu0 0.0
        %772 = vmatprep.subr.mxu0 0.0
        %773 = vmatpush1.msra.mxu0 0.0
        %774 = vmatprep.subr.mxu0 0.0
        %775 = vmatpush1.msra.mxu0 0.0
        %776 = vmatprep.subr.mxu0 0.0
        %777 = vmatpush1.msra.mxu0 0.0
        %778 = vmatprep.subr.mxu0 0.0
        %779 = vmatpush1.msra.mxu0 0.0
        %780 = vmatprep.subr.mxu0 0.0
        %781 = vmatpush1.msra.mxu0 0.0
        %782 = vmatprep.subr.mxu0 0.0
        %783 = vmatpush1.msra.mxu0 0.0
        %784 = vmatprep.subr.mxu0 0.0
        %785 = vmatpush1.msra.mxu0 0.0
        %786 = vmatprep.subr.mxu0 0.0
        %787 = vmatpush1.msra.mxu0 0.0
        %788 = vmatprep.mubr.f32.mxu0 0.0
        %789 = vmatmul.mubr.f32.gmra.mrb[0].mxu0 %v722
        %v790 = vpop.f32.mrb[0].mxu0
        %v791 = vadd.f32 0.0, %v790
        %v792 = vpop.f32.mrb[0].mxu0
        %793 = vdwg.mxu0
        %vm794 = vcmask 64512
        %v796 = vsel %vm794, %v645, 0
        %v799 = vsel %vm794, %v718, 0
        %801 = vmatprep.subr.mxu0 0.0
        %802 = vmatpush1.xpose.msra.mxu0 %v799
        %803 = vmatprep.subr.mxu0 0.0
        %804 = vmatpush1.xpose.msra.mxu0 0.0
        %805 = vmatprep.subr.mxu0 0.0
        %806 = vmatpush1.xpose.msra.mxu0 0.0
        %807 = vmatprep.subr.mxu0 0.0
        %808 = vmatpush1.xpose.msra.mxu0 0.0
        %809 = vmatprep.subr.mxu0 0.0
        %810 = vmatpush1.xpose.msra.mxu0 0.0
        %811 = vmatprep.subr.mxu0 0.0
        %812 = vmatpush1.xpose.msra.mxu0 0.0
        %813 = vmatprep.subr.mxu0 0.0
        %814 = vmatpush1.xpose.msra.mxu0 0.0
        %815 = vmatprep.subr.mxu0 0.0
        %816 = vmatpush1.xpose.msra.mxu0 0.0
        %817 = vmatprep.subr.mxu0 0.0
        %818 = vmatpush1.xpose.msra.mxu0 0.0
        %819 = vmatprep.subr.mxu0 0.0
        %820 = vmatpush1.xpose.msra.mxu0 0.0
        %821 = vmatprep.subr.mxu0 0.0
        %822 = vmatpush1.xpose.msra.mxu0 0.0
        %823 = vmatprep.subr.mxu0 0.0
        %824 = vmatpush1.xpose.msra.mxu0 0.0
        %825 = vmatprep.subr.mxu0 0.0
        %826 = vmatpush1.xpose.msra.mxu0 0.0
        %827 = vmatprep.subr.mxu0 0.0
        %828 = vmatpush1.xpose.msra.mxu0 0.0
        %829 = vmatprep.subr.mxu0 0.0
        %830 = vmatpush1.xpose.msra.mxu0 0.0
        %831 = vmatprep.subr.mxu0 0.0
        %832 = vmatpush1.xpose.msra.mxu0 0.0
        %833 = vmatprep.subr.mxu0 0.0
        %834 = vmatpush1.xpose.msra.mxu0 0.0
        %835 = vmatprep.subr.mxu0 0.0
        %836 = vmatpush1.xpose.msra.mxu0 0.0
        %837 = vmatprep.subr.mxu0 0.0
        %838 = vmatpush1.xpose.msra.mxu0 0.0
        %839 = vmatprep.subr.mxu0 0.0
        %840 = vmatpush1.xpose.msra.mxu0 0.0
        %841 = vmatprep.subr.mxu0 0.0
        %842 = vmatpush1.xpose.msra.mxu0 0.0
        %843 = vmatprep.subr.mxu0 0.0
        %844 = vmatpush1.xpose.msra.mxu0 0.0
        %845 = vmatprep.subr.mxu0 0.0
        %846 = vmatpush1.xpose.msra.mxu0 0.0
        %847 = vmatprep.subr.mxu0 0.0
        %848 = vmatpush1.xpose.msra.mxu0 0.0
        %849 = vmatprep.subr.mxu0 0.0
        %850 = vmatpush1.xpose.msra.mxu0 0.0
        %851 = vmatprep.subr.mxu0 0.0
        %852 = vmatpush1.xpose.msra.mxu0 0.0
        %853 = vmatprep.subr.mxu0 0.0
        %854 = vmatpush1.xpose.msra.mxu0 0.0
        %855 = vmatprep.subr.mxu0 0.0
        %856 = vmatpush1.xpose.msra.mxu0 0.0
        %857 = vmatprep.subr.mxu0 0.0
        %858 = vmatpush1.xpose.msra.mxu0 0.0
        %859 = vmatprep.subr.mxu0 0.0
        %860 = vmatpush1.xpose.msra.mxu0 0.0
        %861 = vmatprep.subr.mxu0 0.0
        %862 = vmatpush1.xpose.msra.mxu0 0.0
        %863 = vmatprep.subr.mxu0 0.0
        %864 = vmatpush1.xpose.msra.mxu0 0.0
        %865 = vmatprep.mubr.f32.mxu0 0.0
        %866 = vmatmul.mubr.f32.gmra.mrb[0].mxu0 %v796
        %v867 = vpop.f32.mrb[0].mxu0
        %v868 = vadd.f32 0.0, %v867
        %v869 = vpop.f32.mrb[0].mxu0
        %870 = vdwg.mxu0
        %v871 = vsel %vm794, %v868, -inf
        %872 = vmax.xlane.f32.xlu0 %v871
        %v873 = vpop.xlane.xlu0 %872
        %v874 = vsub.f32 %v868, %v873
        %v875 = vmul.f32 %v874, 1.442695
        %v876 = vpow.pop %v875
        %v877 = vsel %vm794, %v876, 0.0
        %878 = vadd.xlane.f32.xlu0 %v877
        %v879 = vpop.xlane.xlu0 %878
        %v880 = vrcp.pop %v879
        %v881 = vmul.f32 1.0, %v880
        %v882 = vmul.f32 %v876, %v881
        %883 = vst.msk [vmem:[%s553] sm:$0xff] %vm794, %v882
        %v885 = vsel %vm794, %v882, 0
        %887 = vmatprep.subr.mxu0 0.0
        %888 = vmatpush1.msra.mxu0 %v791
        %889 = vmatprep.subr.mxu0 0.0
        %890 = vmatpush1.msra.mxu0 0.0
        %891 = vmatprep.subr.mxu0 0.0
        %892 = vmatpush1.msra.mxu0 0.0
        %893 = vmatprep.subr.mxu0 0.0
        %894 = vmatpush1.msra.mxu0 0.0
        %895 = vmatprep.subr.mxu0 0.0
        %896 = vmatpush1.msra.mxu0 0.0
        %897 = vmatprep.subr.mxu0 0.0
        %898 = vmatpush1.msra.mxu0 0.0
        %899 = vmatprep.subr.mxu0 0.0
        %900 = vmatpush1.msra.mxu0 0.0
        %901 = vmatprep.subr.mxu0 0.0
        %902 = vmatpush1.msra.mxu0 0.0
        %903 = vmatprep.subr.mxu0 0.0
        %904 = vmatpush1.msra.mxu0 0.0
        %905 = vmatprep.subr.mxu0 0.0
        %906 = vmatpush1.msra.mxu0 0.0
        %907 = vmatprep.subr.mxu0 0.0
        %908 = vmatpush1.msra.mxu0 0.0
        %909 = vmatprep.subr.mxu0 0.0
        %910 = vmatpush1.msra.mxu0 0.0
        %911 = vmatprep.subr.mxu0 0.0
        %912 = vmatpush1.msra.mxu0 0.0
        %913 = vmatprep.subr.mxu0 0.0
        %914 = vmatpush1.msra.mxu0 0.0
        %915 = vmatprep.subr.mxu0 0.0
        %916 = vmatpush1.msra.mxu0 0.0
        %917 = vmatprep.subr.mxu0 0.0
        %918 = vmatpush1.msra.mxu0 0.0
        %919 = vmatprep.subr.mxu0 0.0
        %920 = vmatpush1.msra.mxu0 0.0
        %921 = vmatprep.subr.mxu0 0.0
        %922 = vmatpush1.msra.mxu0 0.0
        %923 = vmatprep.subr.mxu0 0.0
        %924 = vmatpush1.msra.mxu0 0.0
        %925 = vmatprep.subr.mxu0 0.0
        %926 = vmatpush1.msra.mxu0 0.0
        %927 = vmatprep.subr.mxu0 0.0
        %928 = vmatpush1.msra.mxu0 0.0
        %929 = vmatprep.subr.mxu0 0.0
        %930 = vmatpush1.msra.mxu0 0.0
        %931 = vmatprep.subr.mxu0 0.0
        %932 = vmatpush1.msra.mxu0 0.0
        %933 = vmatprep.subr.mxu0 0.0
        %934 = vmatpush1.msra.mxu0 0.0
        %935 = vmatprep.subr.mxu0 0.0
        %936 = vmatpush1.msra.mxu0 0.0
        %937 = vmatprep.subr.mxu0 0.0
        %938 = vmatpush1.msra.mxu0 0.0
        %939 = vmatprep.subr.mxu0 0.0
        %940 = vmatpush1.msra.mxu0 0.0
        %941 = vmatprep.subr.mxu0 0.0
        %942 = vmatpush1.msra.mxu0 0.0
        %943 = vmatprep.subr.mxu0 0.0
        %944 = vmatpush1.msra.mxu0 0.0
        %945 = vmatprep.subr.mxu0 0.0
        %946 = vmatpush1.msra.mxu0 0.0
        %947 = vmatprep.subr.mxu0 0.0
        %948 = vmatpush1.msra.mxu0 0.0
        %949 = vmatprep.subr.mxu0 0.0
        %950 = vmatpush1.msra.mxu0 0.0
        %951 = vmatprep.mubr.f32.mxu0 0.0
        %952 = vmatmul.mubr.f32.gmra.mrb[0].mxu0 %v885
        %v953 = vpop.f32.mrb[0].mxu0
        %v954 = vadd.f32 0.0, %v953
        %v955 = vpop.f32.mrb[0].mxu0
        %956 = vdwg.mxu0
        %957 = vrot.lane.b32.xlu0 %v645, 120
        %v958 = vpop.permute.xlu0 %957
        %959 = vrot.lane.b32.xlu0 %v718, 120
        %v960 = vpop.permute.xlu0 %959
        %v961 = vsel %vm794, %v958, 0
        %v963 = vsel %vm794, %v960, 0
        %965 = vmatprep.subr.mxu0 0.0
        %966 = vmatpush1.xpose.msra.mxu0 %v963
        %967 = vmatprep.subr.mxu0 0.0
        %968 = vmatpush1.xpose.msra.mxu0 0.0
        %969 = vmatprep.subr.mxu0 0.0
        %970 = vmatpush1.xpose.msra.mxu0 0.0
        %971 = vmatprep.subr.mxu0 0.0
        %972 = vmatpush1.xpose.msra.mxu0 0.0
        %973 = vmatprep.subr.mxu0 0.0
        %974 = vmatpush1.xpose.msra.mxu0 0.0
        %975 = vmatprep.subr.mxu0 0.0
        %976 = vmatpush1.xpose.msra.mxu0 0.0
        %977 = vmatprep.subr.mxu0 0.0
        %978 = vmatpush1.xpose.msra.mxu0 0.0
        %979 = vmatprep.subr.mxu0 0.0
        %980 = vmatpush1.xpose.msra.mxu0 0.0
        %981 = vmatprep.subr.mxu0 0.0
        %982 = vmatpush1.xpose.msra.mxu0 0.0
        %983 = vmatprep.subr.mxu0 0.0
        %984 = vmatpush1.xpose.msra.mxu0 0.0
        %985 = vmatprep.subr.mxu0 0.0
        %986 = vmatpush1.xpose.msra.mxu0 0.0
        %987 = vmatprep.subr.mxu0 0.0
        %988 = vmatpush1.xpose.msra.mxu0 0.0
        %989 = vmatprep.subr.mxu0 0.0
        %990 = vmatpush1.xpose.msra.mxu0 0.0
        %991 = vmatprep.subr.mxu0 0.0
        %992 = vmatpush1.xpose.msra.mxu0 0.0
        %993 = vmatprep.subr.mxu0 0.0
        %994 = vmatpush1.xpose.msra.mxu0 0.0
        %995 = vmatprep.subr.mxu0 0.0
        %996 = vmatpush1.xpose.msra.mxu0 0.0
        %997 = vmatprep.subr.mxu0 0.0
        %998 = vmatpush1.xpose.msra.mxu0 0.0
        %999 = vmatprep.subr.mxu0 0.0
        %1000 = vmatpush1.xpose.msra.mxu0 0.0
        %1001 = vmatprep.subr.mxu0 0.0
        %1002 = vmatpush1.xpose.msra.mxu0 0.0
        %1003 = vmatprep.subr.mxu0 0.0
        %1004 = vmatpush1.xpose.msra.mxu0 0.0
        %1005 = vmatprep.subr.mxu0 0.0
        %1006 = vmatpush1.xpose.msra.mxu0 0.0
        %1007 = vmatprep.subr.mxu0 0.0
        %1008 = vmatpush1.xpose.msra.mxu0 0.0
        %1009 = vmatprep.subr.mxu0 0.0
        %1010 = vmatpush1.xpose.msra.mxu0 0.0
        %1011 = vmatprep.subr.mxu0 0.0
        %1012 = vmatpush1.xpose.msra.mxu0 0.0
        %1013 = vmatprep.subr.mxu0 0.0
        %1014 = vmatpush1.xpose.msra.mxu0 0.0
        %1015 = vmatprep.subr.mxu0 0.0
        %1016 = vmatpush1.xpose.msra.mxu0 0.0
        %1017 = vmatprep.subr.mxu0 0.0
        %1018 = vmatpush1.xpose.msra.mxu0 0.0
        %1019 = vmatprep.subr.mxu0 0.0
        %1020 = vmatpush1.xpose.msra.mxu0 0.0
        %1021 = vmatprep.subr.mxu0 0.0
        %1022 = vmatpush1.xpose.msra.mxu0 0.0
        %1023 = vmatprep.subr.mxu0 0.0
        %1024 = vmatpush1.xpose.msra.mxu0 0.0
        %1025 = vmatprep.subr.mxu0 0.0
        %1026 = vmatpush1.xpose.msra.mxu0 0.0
        %1027 = vmatprep.subr.mxu0 0.0
        %1028 = vmatpush1.xpose.msra.mxu0 0.0
        %1029 = vmatprep.mubr.f32.mxu0 0.0
        %1030 = vmatmul.mubr.f32.gmra.mrb[0].mxu0 %v961
        %v1031 = vpop.f32.mrb[0].mxu0
        %v1032 = vadd.f32 0.0, %v1031
        %v1033 = vpop.f32.mrb[0].mxu0
        %1034 = vdwg.mxu0
        %v1035 = vsel %vm794, %v1032, -inf
        %1036 = vmax.xlane.f32.xlu0 %v1035
        %v1037 = vpop.xlane.xlu0 %1036
        %v1038 = vsub.f32 %v1032, %v1037
        %v1039 = vmul.f32 %v1038, 1.442695
        %v1040 = vpow.pop %v1039
        %v1041 = vsel %vm794, %v1040, 0.0
        %1042 = vadd.xlane.f32.xlu0 %v1041
        %v1043 = vpop.xlane.xlu0 %1042
        %v1044 = vrcp.pop %v1043
        %v1045 = vmul.f32 1.0, %v1044
        %v1046 = vmul.f32 %v1040, %v1045
        %s1047 = scalar_lea.vmem %s553, 8 [#allocation18]
        %1048 = vst.msk [vmem:[%s1047] sm:$0xff] %vm794, %v1046
        %1050 = vrot.lane.b32.xlu0 %v791, 120
        %v1051 = vpop.permute.xlu0 %1050
        %v1054 = vsel %vm794, %v1046, 0
        %1056 = vmatprep.subr.mxu0 0.0
        %1057 = vmatpush1.msra.mxu0 %v1051
        %1058 = vmatprep.subr.mxu0 0.0
        %1059 = vmatpush1.msra.mxu0 0.0
        %1060 = vmatprep.subr.mxu0 0.0
        %1061 = vmatpush1.msra.mxu0 0.0
        %1062 = vmatprep.subr.mxu0 0.0
        %1063 = vmatpush1.msra.mxu0 0.0
        %1064 = vmatprep.subr.mxu0 0.0
        %1065 = vmatpush1.msra.mxu0 0.0
        %1066 = vmatprep.subr.mxu0 0.0
        %1067 = vmatpush1.msra.mxu0 0.0
        %1068 = vmatprep.subr.mxu0 0.0
        %1069 = vmatpush1.msra.mxu0 0.0
        %1070 = vmatprep.subr.mxu0 0.0
        %1071 = vmatpush1.msra.mxu0 0.0
        %1072 = vmatprep.subr.mxu0 0.0
        %1073 = vmatpush1.msra.mxu0 0.0
        %1074 = vmatprep.subr.mxu0 0.0
        %1075 = vmatpush1.msra.mxu0 0.0
        %1076 = vmatprep.subr.mxu0 0.0
        %1077 = vmatpush1.msra.mxu0 0.0
        %1078 = vmatprep.subr.mxu0 0.0
        %1079 = vmatpush1.msra.mxu0 0.0
        %1080 = vmatprep.subr.mxu0 0.0
        %1081 = vmatpush1.msra.mxu0 0.0
        %1082 = vmatprep.subr.mxu0 0.0
        %1083 = vmatpush1.msra.mxu0 0.0
        %1084 = vmatprep.subr.mxu0 0.0
        %1085 = vmatpush1.msra.mxu0 0.0
        %1086 = vmatprep.subr.mxu0 0.0
        %1087 = vmatpush1.msra.mxu0 0.0
        %1088 = vmatprep.subr.mxu0 0.0
        %1089 = vmatpush1.msra.mxu0 0.0
        %1090 = vmatprep.subr.mxu0 0.0
        %1091 = vmatpush1.msra.mxu0 0.0
        %1092 = vmatprep.subr.mxu0 0.0
        %1093 = vmatpush1.msra.mxu0 0.0
        %1094 = vmatprep.subr.mxu0 0.0
        %1095 = vmatpush1.msra.mxu0 0.0
        %1096 = vmatprep.subr.mxu0 0.0
        %1097 = vmatpush1.msra.mxu0 0.0
        %1098 = vmatprep.subr.mxu0 0.0
        %1099 = vmatpush1.msra.mxu0 0.0
        %1100 = vmatprep.subr.mxu0 0.0
        %1101 = vmatpush1.msra.mxu0 0.0
        %1102 = vmatprep.subr.mxu0 0.0
        %1103 = vmatpush1.msra.mxu0 0.0
        %1104 = vmatprep.subr.mxu0 0.0
        %1105 = vmatpush1.msra.mxu0 0.0
        %1106 = vmatprep.subr.mxu0 0.0
        %1107 = vmatpush1.msra.mxu0 0.0
        %1108 = vmatprep.subr.mxu0 0.0
        %1109 = vmatpush1.msra.mxu0 0.0
        %1110 = vmatprep.subr.mxu0 0.0
        %1111 = vmatpush1.msra.mxu0 0.0
        %1112 = vmatprep.subr.mxu0 0.0
        %1113 = vmatpush1.msra.mxu0 0.0
        %1114 = vmatprep.subr.mxu0 0.0
        %1115 = vmatpush1.msra.mxu0 0.0
        %1116 = vmatprep.subr.mxu0 0.0
        %1117 = vmatpush1.msra.mxu0 0.0
        %1118 = vmatprep.subr.mxu0 0.0
        %1119 = vmatpush1.msra.mxu0 0.0
        %1120 = vmatprep.mubr.f32.mxu0 0.0
        %1121 = vmatmul.mubr.f32.gmra.mrb[0].mxu0 %v1054
        %v1122 = vpop.f32.mrb[0].mxu0
        %v1123 = vadd.f32 0.0, %v1122
        %v1124 = vpop.f32.mrb[0].mxu0
        %1125 = vdwg.mxu0
        %1126 = vrot.lane.b32.xlu0 %v645, 112
        %v1127 = vpop.permute.xlu0 %1126
        %1128 = vrot.lane.b32.xlu0 %v718, 112
        %v1129 = vpop.permute.xlu0 %1128
        %v1130 = vsel %vm794, %v1127, 0
        %v1132 = vsel %vm794, %v1129, 0
        %1134 = vmatprep.subr.mxu0 0.0
        %1135 = vmatpush1.xpose.msra.mxu0 %v1132
        %1136 = vmatprep.subr.mxu0 0.0
        %1137 = vmatpush1.xpose.msra.mxu0 0.0
        %1138 = vmatprep.subr.mxu0 0.0
        %1139 = vmatpush1.xpose.msra.mxu0 0.0
        %1140 = vmatprep.subr.mxu0 0.0
        %1141 = vmatpush1.xpose.msra.mxu0 0.0
        %1142 = vmatprep.subr.mxu0 0.0
        %1143 = vmatpush1.xpose.msra.mxu0 0.0
        %1144 = vmatprep.subr.mxu0 0.0
        %1145 = vmatpush1.xpose.msra.mxu0 0.0
        %1146 = vmatprep.subr.mxu0 0.0
        %1147 = vmatpush1.xpose.msra.mxu0 0.0
        %1148 = vmatprep.subr.mxu0 0.0
        %1149 = vmatpush1.xpose.msra.mxu0 0.0
        %1150 = vmatprep.subr.mxu0 0.0
        %1151 = vmatpush1.xpose.msra.mxu0 0.0
        %1152 = vmatprep.subr.mxu0 0.0
        %1153 = vmatpush1.xpose.msra.mxu0 0.0
        %1154 = vmatprep.subr.mxu0 0.0
        %1155 = vmatpush1.xpose.msra.mxu0 0.0
        %1156 = vmatprep.subr.mxu0 0.0
        %1157 = vmatpush1.xpose.msra.mxu0 0.0
        %1158 = vmatprep.subr.mxu0 0.0
        %1159 = vmatpush1.xpose.msra.mxu0 0.0
        %1160 = vmatprep.subr.mxu0 0.0
        %1161 = vmatpush1.xpose.msra.mxu0 0.0
        %1162 = vmatprep.subr.mxu0 0.0
        %1163 = vmatpush1.xpose.msra.mxu0 0.0
        %1164 = vmatprep.subr.mxu0 0.0
        %1165 = vmatpush1.xpose.msra.mxu0 0.0
        %1166 = vmatprep.subr.mxu0 0.0
        %1167 = vmatpush1.xpose.msra.mxu0 0.0
        %1168 = vmatprep.subr.mxu0 0.0
        %1169 = vmatpush1.xpose.msra.mxu0 0.0
        %1170 = vmatprep.subr.mxu0 0.0
        %1171 = vmatpush1.xpose.msra.mxu0 0.0
        %1172 = vmatprep.subr.mxu0 0.0
        %1173 = vmatpush1.xpose.msra.mxu0 0.0
        %1174 = vmatprep.subr.mxu0 0.0
        %1175 = vmatpush1.xpose.msra.mxu0 0.0
        %1176 = vmatprep.subr.mxu0 0.0
        %1177 = vmatpush1.xpose.msra.mxu0 0.0
        %1178 = vmatprep.subr.mxu0 0.0
        %1179 = vmatpush1.xpose.msra.mxu0 0.0
        %1180 = vmatprep.subr.mxu0 0.0
        %1181 = vmatpush1.xpose.msra.mxu0 0.0
        %1182 = vmatprep.subr.mxu0 0.0
        %1183 = vmatpush1.xpose.msra.mxu0 0.0
        %1184 = vmatprep.subr.mxu0 0.0
        %1185 = vmatpush1.xpose.msra.mxu0 0.0
        %1186 = vmatprep.subr.mxu0 0.0
        %1187 = vmatpush1.xpose.msra.mxu0 0.0
        %1188 = vmatprep.subr.mxu0 0.0
        %1189 = vmatpush1.xpose.msra.mxu0 0.0
        %1190 = vmatprep.subr.mxu0 0.0
        %1191 = vmatpush1.xpose.msra.mxu0 0.0
        %1192 = vmatprep.subr.mxu0 0.0
        %1193 = vmatpush1.xpose.msra.mxu0 0.0
        %1194 = vmatprep.subr.mxu0 0.0
        %1195 = vmatpush1.xpose.msra.mxu0 0.0
        %1196 = vmatprep.subr.mxu0 0.0
        %1197 = vmatpush1.xpose.msra.mxu0 0.0
        %1198 = vmatprep.mubr.f32.mxu0 0.0
        %1199 = vmatmul.mubr.f32.gmra.mrb[0].mxu0 %v1130
        %v1200 = vpop.f32.mrb[0].mxu0
        %v1201 = vadd.f32 0.0, %v1200
        %v1202 = vpop.f32.mrb[0].mxu0
        %1203 = vdwg.mxu0
        %v1204 = vsel %vm794, %v1201, -inf
        %1205 = vmax.xlane.f32.xlu0 %v1204
        %v1206 = vpop.xlane.xlu0 %1205
        %v1207 = vsub.f32 %v1201, %v1206
        %v1208 = vmul.f32 %v1207, 1.442695
        %v1209 = vpow.pop %v1208
        %v1210 = vsel %vm794, %v1209, 0.0
        %1211 = vadd.xlane.f32.xlu0 %v1210
        %v1212 = vpop.xlane.xlu0 %1211
        %v1213 = vrcp.pop %v1212
        %v1214 = vmul.f32 1.0, %v1213
        %v1215 = vmul.f32 %v1209, %v1214
        %s1216 = scalar_lea.vmem %s553, 16 [#allocation18]
        %1217 = vst.msk [vmem:[%s1216] sm:$0xff] %vm794, %v1215
        %1218 = vrot.lane.b32.xlu0 %v791, 112
        %v1219 = vpop.permute.xlu0 %1218
        %v1222 = vsel %vm794, %v1215, 0
        %1224 = vmatprep.subr.mxu0 0.0
        %1225 = vmatpush1.msra.mxu0 %v1219
        %1226 = vmatprep.subr.mxu0 0.0
        %1227 = vmatpush1.msra.mxu0 0.0
        %1228 = vmatprep.subr.mxu0 0.0
        %1229 = vmatpush1.msra.mxu0 0.0
        %1230 = vmatprep.subr.mxu0 0.0
        %1231 = vmatpush1.msra.mxu0 0.0
        %1232 = vmatprep.subr.mxu0 0.0
        %1233 = vmatpush1.msra.mxu0 0.0
        %1234 = vmatprep.subr.mxu0 0.0
        %1235 = vmatpush1.msra.mxu0 0.0
        %1236 = vmatprep.subr.mxu0 0.0
        %1237 = vmatpush1.msra.mxu0 0.0
        %1238 = vmatprep.subr.mxu0 0.0
        %1239 = vmatpush1.msra.mxu0 0.0
        %1240 = vmatprep.subr.mxu0 0.0
        %1241 = vmatpush1.msra.mxu0 0.0
        %1242 = vmatprep.subr.mxu0 0.0
        %1243 = vmatpush1.msra.mxu0 0.0
        %1244 = vmatprep.subr.mxu0 0.0
        %1245 = vmatpush1.msra.mxu0 0.0
        %1246 = vmatprep.subr.mxu0 0.0
        %1247 = vmatpush1.msra.mxu0 0.0
        %1248 = vmatprep.subr.mxu0 0.0
        %1249 = vmatpush1.msra.mxu0 0.0
        %1250 = vmatprep.subr.mxu0 0.0
        %1251 = vmatpush1.msra.mxu0 0.0
        %1252 = vmatprep.subr.mxu0 0.0
        %1253 = vmatpush1.msra.mxu0 0.0
        %1254 = vmatprep.subr.mxu0 0.0
        %1255 = vmatpush1.msra.mxu0 0.0
        %1256 = vmatprep.subr.mxu0 0.0
        %1257 = vmatpush1.msra.mxu0 0.0
        %1258 = vmatprep.subr.mxu0 0.0
        %1259 = vmatpush1.msra.mxu0 0.0
        %1260 = vmatprep.subr.mxu0 0.0
        %1261 = vmatpush1.msra.mxu0 0.0
        %1262 = vmatprep.subr.mxu0 0.0
        %1263 = vmatpush1.msra.mxu0 0.0
        %1264 = vmatprep.subr.mxu0 0.0
        %1265 = vmatpush1.msra.mxu0 0.0
        %1266 = vmatprep.subr.mxu0 0.0
        %1267 = vmatpush1.msra.mxu0 0.0
        %1268 = vmatprep.subr.mxu0 0.0
        %1269 = vmatpush1.msra.mxu0 0.0
        %1270 = vmatprep.subr.mxu0 0.0
        %1271 = vmatpush1.msra.mxu0 0.0
        %1272 = vmatprep.subr.mxu0 0.0
        %1273 = vmatpush1.msra.mxu0 0.0
        %1274 = vmatprep.subr.mxu0 0.0
        %1275 = vmatpush1.msra.mxu0 0.0
        %1276 = vmatprep.subr.mxu0 0.0
        %1277 = vmatpush1.msra.mxu0 0.0
        %1278 = vmatprep.subr.mxu0 0.0
        %1279 = vmatpush1.msra.mxu0 0.0
        %1280 = vmatprep.subr.mxu0 0.0
        %1281 = vmatpush1.msra.mxu0 0.0
        %1282 = vmatprep.subr.mxu0 0.0
        %1283 = vmatpush1.msra.mxu0 0.0
        %1284 = vmatprep.subr.mxu0 0.0
        %1285 = vmatpush1.msra.mxu0 0.0
        %1286 = vmatprep.subr.mxu0 0.0
        %1287 = vmatpush1.msra.mxu0 0.0
        %1288 = vmatprep.mubr.f32.mxu0 0.0
        %1289 = vmatmul.mubr.f32.gmra.mrb[0].mxu0 %v1222
        %v1290 = vpop.f32.mrb[0].mxu0
        %v1291 = vadd.f32 0.0, %v1290
        %v1292 = vpop.f32.mrb[0].mxu0
        %1293 = vdwg.mxu0
        %1294 = vrot.lane.b32.xlu0 %v645, 104
        %v1295 = vpop.permute.xlu0 %1294
        %1296 = vrot.lane.b32.xlu0 %v718, 104
        %v1297 = vpop.permute.xlu0 %1296
        %v1298 = vsel %vm794, %v1295, 0
        %v1300 = vsel %vm794, %v1297, 0
        %1302 = vmatprep.subr.mxu0 0.0
        %1303 = vmatpush1.xpose.msra.mxu0 %v1300
        %1304 = vmatprep.subr.mxu0 0.0
        %1305 = vmatpush1.xpose.msra.mxu0 0.0
        %1306 = vmatprep.subr.mxu0 0.0
        %1307 = vmatpush1.xpose.msra.mxu0 0.0
        %1308 = vmatprep.subr.mxu0 0.0
        %1309 = vmatpush1.xpose.msra.mxu0 0.0
        %1310 = vmatprep.subr.mxu0 0.0
        %1311 = vmatpush1.xpose.msra.mxu0 0.0
        %1312 = vmatprep.subr.mxu0 0.0
        %1313 = vmatpush1.xpose.msra.mxu0 0.0
        %1314 = vmatprep.subr.mxu0 0.0
        %1315 = vmatpush1.xpose.msra.mxu0 0.0
        %1316 = vmatprep.subr.mxu0 0.0
        %1317 = vmatpush1.xpose.msra.mxu0 0.0
        %1318 = vmatprep.subr.mxu0 0.0
        %1319 = vmatpush1.xpose.msra.mxu0 0.0
        %1320 = vmatprep.subr.mxu0 0.0
        %1321 = vmatpush1.xpose.msra.mxu0 0.0
        %1322 = vmatprep.subr.mxu0 0.0
        %1323 = vmatpush1.xpose.msra.mxu0 0.0
        %1324 = vmatprep.subr.mxu0 0.0
        %1325 = vmatpush1.xpose.msra.mxu0 0.0
        %1326 = vmatprep.subr.mxu0 0.0
        %1327 = vmatpush1.xpose.msra.mxu0 0.0
        %1328 = vmatprep.subr.mxu0 0.0
        %1329 = vmatpush1.xpose.msra.mxu0 0.0
        %1330 = vmatprep.subr.mxu0 0.0
        %1331 = vmatpush1.xpose.msra.mxu0 0.0
        %1332 = vmatprep.subr.mxu0 0.0
        %1333 = vmatpush1.xpose.msra.mxu0 0.0
        %1334 = vmatprep.subr.mxu0 0.0
        %1335 = vmatpush1.xpose.msra.mxu0 0.0
        %1336 = vmatprep.subr.mxu0 0.0
        %1337 = vmatpush1.xpose.msra.mxu0 0.0
        %1338 = vmatprep.subr.mxu0 0.0
        %1339 = vmatpush1.xpose.msra.mxu0 0.0
        %1340 = vmatprep.subr.mxu0 0.0
        %1341 = vmatpush1.xpose.msra.mxu0 0.0
        %1342 = vmatprep.subr.mxu0 0.0
        %1343 = vmatpush1.xpose.msra.mxu0 0.0
        %1344 = vmatprep.subr.mxu0 0.0
        %1345 = vmatpush1.xpose.msra.mxu0 0.0
        %1346 = vmatprep.subr.mxu0 0.0
        %1347 = vmatpush1.xpose.msra.mxu0 0.0
        %1348 = vmatprep.subr.mxu0 0.0
        %1349 = vmatpush1.xpose.msra.mxu0 0.0
        %1350 = vmatprep.subr.mxu0 0.0
        %1351 = vmatpush1.xpose.msra.mxu0 0.0
        %1352 = vmatprep.subr.mxu0 0.0
        %1353 = vmatpush1.xpose.msra.mxu0 0.0
        %1354 = vmatprep.subr.mxu0 0.0
        %1355 = vmatpush1.xpose.msra.mxu0 0.0
        %1356 = vmatprep.subr.mxu0 0.0
        %1357 = vmatpush1.xpose.msra.mxu0 0.0
        %1358 = vmatprep.subr.mxu0 0.0
        %1359 = vmatpush1.xpose.msra.mxu0 0.0
        %1360 = vmatprep.subr.mxu0 0.0
        %1361 = vmatpush1.xpose.msra.mxu0 0.0
        %1362 = vmatprep.subr.mxu0 0.0
        %1363 = vmatpush1.xpose.msra.mxu0 0.0
        %1364 = vmatprep.subr.mxu0 0.0
        %1365 = vmatpush1.xpose.msra.mxu0 0.0
        %1366 = vmatprep.mubr.f32.mxu0 0.0
        %1367 = vmatmul.mubr.f32.gmra.mrb[0].mxu0 %v1298
        %v1368 = vpop.f32.mrb[0].mxu0
        %v1369 = vadd.f32 0.0, %v1368
        %v1370 = vpop.f32.mrb[0].mxu0
        %1371 = vdwg.mxu0
        %v1372 = vsel %vm794, %v1369, -inf
        %1373 = vmax.xlane.f32.xlu0 %v1372
        %v1374 = vpop.xlane.xlu0 %1373
        %v1375 = vsub.f32 %v1369, %v1374
        %v1376 = vmul.f32 %v1375, 1.442695
        %v1377 = vpow.pop %v1376
        %v1378 = vsel %vm794, %v1377, 0.0
        %1379 = vadd.xlane.f32.xlu0 %v1378
        %v1380 = vpop.xlane.xlu0 %1379
        %v1381 = vrcp.pop %v1380
        %v1382 = vmul.f32 1.0, %v1381
        %v1383 = vmul.f32 %v1377, %v1382
        %s1384 = scalar_lea.vmem %s553, 24 [#allocation18]
        %1385 = vst.msk [vmem:[%s1384] sm:$0xff] %vm794, %v1383
        %1386 = vrot.lane.b32.xlu0 %v791, 104
        %v1387 = vpop.permute.xlu0 %1386
        %v1390 = vsel %vm794, %v1383, 0
        %1392 = vmatprep.subr.mxu0 0.0
        %1393 = vmatpush1.msra.mxu0 %v1387
        %1394 = vmatprep.subr.mxu0 0.0
        %1395 = vmatpush1.msra.mxu0 0.0
        %1396 = vmatprep.subr.mxu0 0.0
        %1397 = vmatpush1.msra.mxu0 0.0
        %1398 = vmatprep.subr.mxu0 0.0
        %1399 = vmatpush1.msra.mxu0 0.0
        %1400 = vmatprep.subr.mxu0 0.0
        %1401 = vmatpush1.msra.mxu0 0.0
        %1402 = vmatprep.subr.mxu0 0.0
        %1403 = vmatpush1.msra.mxu0 0.0
        %1404 = vmatprep.subr.mxu0 0.0
        %1405 = vmatpush1.msra.mxu0 0.0
        %1406 = vmatprep.subr.mxu0 0.0
        %1407 = vmatpush1.msra.mxu0 0.0
        %1408 = vmatprep.subr.mxu0 0.0
        %1409 = vmatpush1.msra.mxu0 0.0
        %1410 = vmatprep.subr.mxu0 0.0
        %1411 = vmatpush1.msra.mxu0 0.0
        %1412 = vmatprep.subr.mxu0 0.0
        %1413 = vmatpush1.msra.mxu0 0.0
        %1414 = vmatprep.subr.mxu0 0.0
        %1415 = vmatpush1.msra.mxu0 0.0
        %1416 = vmatprep.subr.mxu0 0.0
        %1417 = vmatpush1.msra.mxu0 0.0
        %1418 = vmatprep.subr.mxu0 0.0
        %1419 = vmatpush1.msra.mxu0 0.0
        %1420 = vmatprep.subr.mxu0 0.0
        %1421 = vmatpush1.msra.mxu0 0.0
        %1422 = vmatprep.subr.mxu0 0.0
        %1423 = vmatpush1.msra.mxu0 0.0
        %1424 = vmatprep.subr.mxu0 0.0
        %1425 = vmatpush1.msra.mxu0 0.0
        %1426 = vmatprep.subr.mxu0 0.0
        %1427 = vmatpush1.msra.mxu0 0.0
        %1428 = vmatprep.subr.mxu0 0.0
        %1429 = vmatpush1.msra.mxu0 0.0
        %1430 = vmatprep.subr.mxu0 0.0
        %1431 = vmatpush1.msra.mxu0 0.0
        %1432 = vmatprep.subr.mxu0 0.0
        %1433 = vmatpush1.msra.mxu0 0.0
        %1434 = vmatprep.subr.mxu0 0.0
        %1435 = vmatpush1.msra.mxu0 0.0
        %1436 = vmatprep.subr.mxu0 0.0
        %1437 = vmatpush1.msra.mxu0 0.0
        %1438 = vmatprep.subr.mxu0 0.0
        %1439 = vmatpush1.msra.mxu0 0.0
        %1440 = vmatprep.subr.mxu0 0.0
        %1441 = vmatpush1.msra.mxu0 0.0
        %1442 = vmatprep.subr.mxu0 0.0
        %1443 = vmatpush1.msra.mxu0 0.0
        %1444 = vmatprep.subr.mxu0 0.0
        %1445 = vmatpush1.msra.mxu0 0.0
        %1446 = vmatprep.subr.mxu0 0.0
        %1447 = vmatpush1.msra.mxu0 0.0
        %1448 = vmatprep.subr.mxu0 0.0
        %1449 = vmatpush1.msra.mxu0 0.0
        %1450 = vmatprep.subr.mxu0 0.0
        %1451 = vmatpush1.msra.mxu0 0.0
        %1452 = vmatprep.subr.mxu0 0.0
        %1453 = vmatpush1.msra.mxu0 0.0
        %1454 = vmatprep.subr.mxu0 0.0
        %1455 = vmatpush1.msra.mxu0 0.0
        %1456 = vmatprep.mubr.f32.mxu0 0.0
        %1457 = vmatmul.mubr.f32.gmra.mrb[0].mxu0 %v1390
        %v1458 = vpop.f32.mrb[0].mxu0
        %v1459 = vadd.f32 0.0, %v1458
        %v1460 = vpop.f32.mrb[0].mxu0
        %1461 = vdwg.mxu0
        %1463 = vrot.lane.b32.xlu0 %v1123, 8
        %v1464 = vpop.permute.xlu0 %1463
        %1467 = vrot.lane.b32.xlu0 %v1291, 16
        %v1468 = vpop.permute.xlu0 %1467
        %1471 = vrot.lane.b32.xlu0 %v1459, 24
        %v1472 = vpop.permute.xlu0 %1471
        %v1474 = vsel %vm794, %v954, %v1464
        %vm1475 = vcmask 130048
        %v1476 = vsel %vm1475, %v1474, %v1468
        %vm1477 = vcmask 195584
        %v1478 = vsel %vm1477, %v1476, %v1472
        %s1479 = scalar_lea.vmem [#allocation13], %s558
        %v1480 = vld [vmem:[%s1479] sm:$0xff]
        %v1481 = vld [vmem:[%s1479 + $0x8] sm:$0xff]
        %v1482 = vld [vmem:[%s1479 + $0x10] sm:$0xff]
        %v1483 = vld [vmem:[%s1479 + $0x18] sm:$0xff]
        %v1485 = vsel %vm574, %v1478, 0
        %1487 = vmatprep.subr.mxu0 0.0
        %1488 = vmatpush1.msra.mxu0 %v1480
        %1489 = vmatprep.subr.mxu0 0.0
        %1490 = vmatpush1.msra.mxu0 %v1481
        %1491 = vmatprep.subr.mxu0 0.0
        %1492 = vmatpush1.msra.mxu0 %v1482
        %1493 = vmatprep.subr.mxu0 0.0
        %1494 = vmatpush1.msra.mxu0 %v1483
        %1495 = vmatprep.subr.mxu0 0.0
        %1496 = vmatpush1.msra.mxu0 0.0
        %1497 = vmatprep.subr.mxu0 0.0
        %1498 = vmatpush1.msra.mxu0 0.0
        %1499 = vmatprep.subr.mxu0 0.0
        %1500 = vmatpush1.msra.mxu0 0.0
        %1501 = vmatprep.subr.mxu0 0.0
        %1502 = vmatpush1.msra.mxu0 0.0
        %1503 = vmatprep.subr.mxu0 0.0
        %1504 = vmatpush1.msra.mxu0 0.0
        %1505 = vmatprep.subr.mxu0 0.0
        %1506 = vmatpush1.msra.mxu0 0.0
        %1507 = vmatprep.subr.mxu0 0.0
        %1508 = vmatpush1.msra.mxu0 0.0
        %1509 = vmatprep.subr.mxu0 0.0
        %1510 = vmatpush1.msra.mxu0 0.0
        %1511 = vmatprep.subr.mxu0 0.0
        %1512 = vmatpush1.msra.mxu0 0.0
        %1513 = vmatprep.subr.mxu0 0.0
        %1514 = vmatpush1.msra.mxu0 0.0
        %1515 = vmatprep.subr.mxu0 0.0
        %1516 = vmatpush1.msra.mxu0 0.0
        %1517 = vmatprep.subr.mxu0 0.0
        %1518 = vmatpush1.msra.mxu0 0.0
        %1519 = vmatprep.subr.mxu0 0.0
        %1520 = vmatpush1.msra.mxu0 0.0
        %1521 = vmatprep.subr.mxu0 0.0
        %1522 = vmatpush1.msra.mxu0 0.0
        %1523 = vmatprep.subr.mxu0 0.0
        %1524 = vmatpush1.msra.mxu0 0.0
        %1525 = vmatprep.subr.mxu0 0.0
        %1526 = vmatpush1.msra.mxu0 0.0
        %1527 = vmatprep.subr.mxu0 0.0
        %1528 = vmatpush1.msra.mxu0 0.0
        %1529 = vmatprep.subr.mxu0 0.0
        %1530 = vmatpush1.msra.mxu0 0.0
        %1531 = vmatprep.subr.mxu0 0.0
        %1532 = vmatpush1.msra.mxu0 0.0
        %1533 = vmatprep.subr.mxu0 0.0
        %1534 = vmatpush1.msra.mxu0 0.0
        %1535 = vmatprep.subr.mxu0 0.0
        %1536 = vmatpush1.msra.mxu0 0.0
        %1537 = vmatprep.subr.mxu0 0.0
        %1538 = vmatpush1.msra.mxu0 0.0
        %1539 = vmatprep.subr.mxu0 0.0
        %1540 = vmatpush1.msra.mxu0 0.0
        %1541 = vmatprep.subr.mxu0 0.0
        %1542 = vmatpush1.msra.mxu0 0.0
        %1543 = vmatprep.subr.mxu0 0.0
        %1544 = vmatpush1.msra.mxu0 0.0
        %1545 = vmatprep.subr.mxu0 0.0
        %1546 = vmatpush1.msra.mxu0 0.0
        %1547 = vmatprep.subr.mxu0 0.0
        %1548 = vmatpush1.msra.mxu0 0.0
        %1549 = vmatprep.subr.mxu0 0.0
        %1550 = vmatpush1.msra.mxu0 0.0
        %1551 = vmatprep.mubr.f32.mxu0 0.0
        %1552 = vmatmul.mubr.f32.gmra.mrb[0].mxu0 %v1485
        %v1553 = vpop.f32.mrb[0].mxu0
        %v1554 = vadd.f32 %v555, %v1553
        %v1555 = vpop.f32.mrb[0].mxu0
        %1556 = vdwg.mxu0
        %v1557 = vsel %vm574, %v1554, 0.0
        %1558 = vadd.xlane.f32.xlu0 %v1557
        %v1559 = vpop.xlane.xlu0 %1558
        %v1560 = vrcp.pop 32.0
        %v1561 = vmul.f32 %v1559, %v1560
        %v1562 = vsub.f32 %v1554, %v1561
        %v1563 = vmul.f32 %v1562, %v1562
        %v1564 = vsel %vm574, %v1563, 0.0
        %1565 = vadd.xlane.f32.xlu0 %v1564
        %v1566 = vpop.xlane.xlu0 %1565
        %v1567 = vmul.f32 %v1566, %v1560
        %v1568 = vadd.f32 %v1567, 1e-06
        %v1569 = vrsqrt.pop %v1568
        %v1570 = vmul.f32 %v1562, %v1569
        %v1571 = vld [vmem:[#allocation14] sm:$0x1]
        %v1573 = vlaneseq
        %v1574 = vshrl.u32 %v1573, 7
        %v1575 = vsub.s32 0, %v1574
        %v1576 = vrot.slane %v1571, %v1575
        %v1578 = vmul.f32 %v1570, %v1576
        %v1579 = vld [vmem:[#allocation16] sm:$0x1]
        %v1581 = vlaneseq
        %v1582 = vshrl.u32 %v1581, 7
        %v1583 = vsub.s32 0, %v1582
        %v1584 = vrot.slane %v1579, %v1583
        %v1586 = vadd.f32 %v1578, %v1584
        %1587 = vst.msk [vmem:[%s546] sm:$0xff] %vm574, %v1586
        %s1588 = sand.u32 %s261, 1
        %s1589 = scalar_lea.sflag [#allocation4], %s1588
        %s1590 = sand.u32 %s261, 1
        %s1591 = smul.addr %s1590, 8
        %s1592 = scalar_lea.vmem [#allocation17], %s1591
        %s1593 = sand.u32 %s289, 1
        %s1594 = scalar_lea.sflag [#allocation19], %s1593
        %s1595 = sand.u32 %s289, 1
        %s1596 = smul.addr %s1595, 32
        %s1597 = scalar_lea.vmem [#allocation18], %s1596
        // Predicated region
        $region93: #{tpu_custom_call.1} parent=55 // pred_check
          %p1598 = pneg %p271
        $region94: #{tpu_custom_call.1} parent=55 // pred_check_branch
          %1600 = sbr.rel (%p1598) target = $region96
        $region95: #{tpu_custom_call.1} parent=55 // pred_region
          %s1602 = ssub.s32 128, 128
          %1603 = vsyncadd %s1589, %s1602
          %s1604 = smul.addr %s41, 128
          %s1605 = scalar_lea.hbm %s9, %s1604
          %s1607 = sshll.u32 %s1592, 4
          %s1608 = int_to_ptr.vmem [resolvable:$true] %s1607
          %1610 = dma.vmem_to_hbm [thread:$0]  %s1608, 128, %s1605, %s1589
        $region96: #{tpu_custom_call.1} parent=55 // pred_fallthru
          _
        // Predicated region
        $region97: #{tpu_custom_call.1} parent=55 // pred_check
          %p1611 = pneg %p299
        $region98: #{tpu_custom_call.1} parent=55 // pred_check_branch
          %1613 = sbr.rel (%p1611) target = $region100
        $region99: #{tpu_custom_call.1} parent=55 // pred_region
          %s1614 = smul.u32 4, %s42
          %s1616 = ssub.s32 512, 512
          %1617 = vsyncadd %s1594, %s1616
          %s1618 = smul.addr %s41, 4
          %s1619 = sadd.s32 %s1614, %s1618
          %s1620 = smul.addr %s1619, 128
          %s1621 = scalar_lea.hbm %s10, %s1620
          %s1622 = sshll.u32 %s1597, 4
          %s1623 = int_to_ptr.vmem [resolvable:$true] %s1622
          %1628 = dma.vmem_to_hbm [thread:$0]  %s1623, 512, %s1621, %s1594, 128, 128, 8
        $region100: #{tpu_custom_call.1} parent=55 // pred_fallthru
          _
      $region56: #{tpu_custom_call.1} parent=5 // pred_fallthru
        _
      %p1629 = scmp.le.s32.totalorder 2, %s32
      // Predicated region
      $region101: #{tpu_custom_call.1} parent=5 // pred_check
        %p1630 = pneg %p1629
      $region102: #{tpu_custom_call.1} parent=5 // pred_check_branch
        %1632 = sbr.rel (%p1630) target = $region104
      $region103: #{tpu_custom_call.1} parent=5 // pred_region
        %s1633 = ssub.s32 %s32, 2
        // Predicated region
        $region105: #{tpu_custom_call.1} parent=103 // pred_check
          %p1634 = pneg %p277
        $region106: #{tpu_custom_call.1} parent=103 // pred_check_branch
          %1636 = sbr.rel (%p1634) target = $region108
        $region107: #{tpu_custom_call.1} parent=103 // pred_region
          %s1637 = sand.u32 %s262, 1
          %s1638 = scalar_lea.sflag [#allocation4], %s1637
          %s1639 = sand.u32 %s262, 1
          %s1640 = smul.addr %s1639, 8
          %s1641 = scalar_lea.vmem [#allocation17], %s1640
          %1642 = dma.done %s1638, 128
        $region108: #{tpu_custom_call.1} parent=103 // pred_fallthru
          _
        // Predicated region
        $region109: #{tpu_custom_call.1} parent=103 // pred_check
          %p1643 = pneg %p305
        $region110: #{tpu_custom_call.1} parent=103 // pred_check_branch
          %1645 = sbr.rel (%p1643) target = $region112
        $region111: #{tpu_custom_call.1} parent=103 // pred_region
          %s1646 = sand.u32 %s290, 1
          %s1647 = scalar_lea.sflag [#allocation19], %s1646
          %s1648 = sand.u32 %s290, 1
          %s1649 = smul.addr %s1648, 32
          %s1650 = scalar_lea.vmem [#allocation18], %s1649
          %1651 = dma.done %s1647, 512
        $region112: #{tpu_custom_call.1} parent=103 // pred_fallthru
          _
      $region104: #{tpu_custom_call.1} parent=5 // pred_fallthru
        _
    $region6: #{tpu_custom_call.1} parent=1 // loop_footer
      %s36 = sadd.s32 1, %s32
    $region7: #{tpu_custom_call.1} parent=1 // loop_footer_branch
      %31 = sbr.rel target = $region3
    $region8: #{tpu_custom_call.1} parent=1 // loop_exit
      _
    %1652 = vsyncpa [#allocation3], 1
    %s1653 = scalar_lea.sflag [#allocation3], 1
    %1654 = vsyncpa %s1653, 1
    %1655 = vsyncpa [#allocation6], 1
    %s1656 = scalar_lea.sflag [#allocation6], 1
    %1657 = vsyncpa %s1656, 1
    %1658 = vsyncpa [#allocation9], 1
    %1659 = vsyncpa [#allocation12], 1
    %1660 = vsyncpa [#allocation15], 1
    %1661 = vsyncpa [#allocation4], 1
    %s1662 = scalar_lea.sflag [#allocation4], 1
    %1663 = vsyncpa %s1662, 1
    %1664 = vsyncpa [#allocation19], 1
    %s1665 = scalar_lea.sflag [#allocation19], 1
    %1666 = vsyncpa %s1665, 1

</llo_original>
